<compile_context>
chip_gen: v7x
topology: tpu7x:2x2x1
jax: 0.10.0
libtpu: 0.0.40
codegen_flags: <defaults>
</compile_context>

<pallas_src>
import functools
import math

import jax
import jax.numpy as jnp
from jax.experimental import pallas as pl
from jax.experimental.pallas import tpu as pltpu

EMBED = 32        # embed_dim
HIDDEN = 64       # hidden_dim of MLP
HEADS = 4         # num_heads
HEAD_DIM = EMBED // HEADS
LN_EPS = 1e-5     # torch.nn.LayerNorm default
VEC_W = 3 * EMBED  # lane width of the stacked bias/LN-vector slab


def _layer_norm(v, w, b):
    mu = jnp.mean(v, axis=-1, keepdims=True)
    var = jnp.mean((v - mu) ** 2, axis=-1, keepdims=True)
    return (v - mu) * jax.lax.rsqrt(var + LN_EPS) * w + b


def _attention_block_kernel(x_ref, w_ref, w2_ref, vec_ref, out_ref, *, batch, seq):
    # x is the flattened (B*T, E) row slab; all linears operate on it directly.
    x = x_ref[...]                              # (B*T, E)
    w_all = w_ref[...]                          # (E, 3E + E + H)
    vecs = vec_ref[...]                         # (8, 3E)

    # ---- static unpack of the packed parameter slabs ----
    ln1w = vecs[0:1, :EMBED]
    ln1b = vecs[1:2, :EMBED]
    bqkv = vecs[2:3, :3 * EMBED]                # q-columns pre-scaled at pack time
    bo = vecs[3:4, :EMBED]
    ln2w = vecs[4:5, :EMBED]
    ln2b = vecs[5:6, :EMBED]
    b1 = vecs[6:7, :HIDDEN]
    b2 = vecs[7:8, :EMBED]

    wqkv = w_all[:, 0:3 * EMBED]                # q-columns pre-scaled at pack time
    wo = w_all[:, 3 * EMBED:4 * EMBED]
    w1 = w_all[:, 4 * EMBED:4 * EMBED + HIDDEN]

    # ---- LayerNorm 1 + fused QKV projection (single MXU call) ----
    inp = _layer_norm(x, ln1w, ln1b)
    qkv = jnp.dot(inp, wqkv, preferred_element_type=jnp.float32) + bqkv

    # ---- per-head attention, batched over the batch dim (3-D einsums) ----
    head_outs = []
    for h in range(HEADS):
        o_q = h * HEAD_DIM
        o_k = EMBED + h * HEAD_DIM
        o_v = 2 * EMBED + h * HEAD_DIM
        qh = qkv[:, o_q:o_q + HEAD_DIM].reshape(batch, seq, HEAD_DIM)
        kh = qkv[:, o_k:o_k + HEAD_DIM].reshape(batch, seq, HEAD_DIM)
        vh = qkv[:, o_v:o_v + HEAD_DIM].reshape(batch, seq, HEAD_DIM)
        s = jnp.einsum('bqd,bkd->bqk', qh, kh,
                       preferred_element_type=jnp.float32)
        s = s - jnp.max(s, axis=-1, keepdims=True)
        p = jnp.exp(s)
        p = p * pl.reciprocal(jnp.sum(p, axis=-1, keepdims=True), approx=True)
        o = jnp.einsum('bqk,bkd->bqd', p, vh,
                       preferred_element_type=jnp.float32)
        head_outs.append(o.reshape(batch * seq, HEAD_DIM))
    attn = jnp.concatenate(head_outs, axis=-1)            # (B*T, E)
    attn = jnp.dot(attn, wo, preferred_element_type=jnp.float32) + bo

    x1 = x + attn                                          # residual 1

    # ---- LayerNorm 2 + MLP (Linear -> exact GELU -> Linear) on the slab ----
    h2 = _layer_norm(x1, ln2w, ln2b)
    m = jnp.dot(h2, w1, preferred_element_type=jnp.float32) + b1
    m = 0.5 * m * (1.0 + jax.lax.erf(m * (1.0 / math.sqrt(2.0))))   # exact GELU
    m = jnp.dot(m, w2_ref[...], preferred_element_type=jnp.float32) + b2

    out_ref[...] = (x1 + m).astype(out_ref.dtype)          # residual 2


def pack_params(params):
    """Collapse the 13 nn-shaped parameters into 3 packed operands (run once).

    The softmax scale 1/sqrt(head_dim) is folded into the q-columns of the
    fused QKV projection so the kernel never multiplies by it.
    """
    ln1w, ln1b, wqkv, bqkv, wo, bo, ln2w, ln2b, w1, b1, w2, b2 = params
    scale = 1.0 / math.sqrt(HEAD_DIM)
    qkv_scale = jnp.concatenate(
        [jnp.full((EMBED,), scale, jnp.float32),
         jnp.ones((2 * EMBED,), jnp.float32)])[None, :]
    wqkv_s = wqkv * qkv_scale
    bqkv_s = bqkv * qkv_scale

    w_slab = jnp.concatenate([wqkv_s, wo, w1], axis=1)      # (E, 3E+E+H)

    def row(v):
        v2 = v.reshape(1, -1).astype(jnp.float32)
        return jnp.pad(v2, ((0, 0), (0, VEC_W - v2.shape[1])))

    vec_slab = jnp.concatenate(
        [row(ln1w), row(ln1b), row(bqkv_s), row(bo),
         row(ln2w), row(ln2b), row(b1), row(b2)], axis=0)   # (8, 3E)

    return (w_slab, w2.astype(jnp.float32), vec_slab)


@jax.jit
def attention_block(x, packed):
    w_slab, w2, vec_slab = packed
    B, T, E = x.shape
    assert E == EMBED
    BT = B * T
    x2d = x.reshape(BT, E)             # free metadata reshape in the wrapper

    # Advisory cost estimate so XLA schedules/overlaps this tiny call sensibly.
    flops = (2 * BT * E * 3 * E                               # QKV projection
             + 2 * 2 * B * HEADS * T * T * HEAD_DIM           # QK^T and P@V
             + 2 * BT * E * E                                 # output projection
             + 2 * BT * E * HIDDEN + 2 * BT * HIDDEN * E)     # MLP
    transcendentals = B * HEADS * T * T + BT * HIDDEN + 4 * BT
    bytes_accessed = 4 * (2 * BT * E + w_slab.size + w2.size + vec_slab.size)

    vmem = lambda: pl.BlockSpec(memory_space=pltpu.MemorySpace.VMEM)
    out2d = pl.pallas_call(
        functools.partial(_attention_block_kernel, batch=B, seq=T),
        out_shape=jax.ShapeDtypeStruct((BT, E), x.dtype),
        in_specs=[vmem() for _ in range(4)],
        out_specs=vmem(),
        input_output_aliases={0: 0},   # x2d (an internal intermediate) is donated
        cost_estimate=pl.CostEstimate(flops=flops,
                                      transcendentals=transcendentals,
                                      bytes_accessed=bytes_accessed),
    )(x2d, w_slab, w2, vec_slab)
    return out2d.reshape(B, T, E)


def reference(x, params):
    """Pure-JAX reference matching torch semantics (dropout=0, eval)."""
    ln1w, ln1b, wqkv, bqkv, wo, bo, ln2w, ln2b, w1, b1, w2, b2 = params
    B, T, E = x.shape
    inp = _layer_norm(x, ln1w, ln1b)
    qkv = inp @ wqkv + bqkv
    q, k, v = jnp.split(qkv, 3, axis=-1)

    def split_heads(t):
        return t.reshape(B, T, HEADS, HEAD_DIM).transpose(0, 2, 1, 3)

    qh, kh, vh = map(split_heads, (q, k, v))
    s = jnp.einsum('bhqd,bhkd->bhqk', qh, kh) / math.sqrt(HEAD_DIM)
    p = jax.nn.softmax(s, axis=-1)
    a = jnp.einsum('bhqk,bhkd->bhqd', p, vh)
    a = a.transpose(0, 2, 1, 3).reshape(B, T, E)
    a = a @ wo + bo
    x1 = x + a
    h = _layer_norm(x1, ln2w, ln2b)
    m = h @ w1 + b1
    m = 0.5 * m * (1.0 + jax.lax.erf(m / math.sqrt(2.0)))
    m = m @ w2 + b2
    return x1 + m


def init_params(key):
    """Deterministic synthetic parameters with nn.MultiheadAttention /
    nn.Linear / nn.LayerNorm shapes (weights pre-transposed to x @ W form)."""
    ks = jax.random.split(key, 6)
    f32 = jnp.float32
    ln1w = jnp.ones((1, EMBED), f32)
    ln1b = jnp.zeros((1, EMBED), f32)
    ln2w = jnp.ones((1, EMBED), f32)
    ln2b = jnp.zeros((1, EMBED), f32)
    # in_proj_weight is (3E, E) in torch; store transposed (E, 3E).
    wqkv = 0.1 * jax.random.normal(ks[0], (EMBED, 3 * EMBED), f32)
    bqkv = 0.02 * jax.random.normal(ks[1], (1, 3 * EMBED), f32)
    # out_proj: Linear(E, E), stored transposed.
    wo = 0.1 * jax.random.normal(ks[2], (EMBED, EMBED), f32)
    bo = jnp.zeros((1, EMBED), f32)
    # MLP: Linear(E, H), Linear(H, E), stored transposed.
    w1 = 0.1 * jax.random.normal(ks[3], (EMBED, HIDDEN), f32)
    b1 = 0.02 * jax.random.normal(ks[4], (1, HIDDEN), f32)
    w2 = 0.1 * jax.random.normal(ks[5], (HIDDEN, EMBED), f32)
    b2 = jnp.zeros((1, EMBED), f32)
    return (ln1w, ln1b, wqkv, bqkv, wo, bo, ln2w, ln2b, w1, b1, w2, b2)


if __name__ == "__main__":
    key = jax.random.PRNGKey(0)
    k_x, k_p = jax.random.split(key)

    B, T = 2, 8                      # batch, sequence length
    x = jax.random.normal(k_x, (B, T, EMBED), jnp.float32)
    params = init_params(k_p)
    packed = pack_params(params)     # one-time host-side parameter packing

    # Reference is computed before the kernel call (input 0 of the pallas_call
    # is aliased to its output).
    ref = reference(x, params)

    out = attention_block(x, packed)
    out = jax.block_until_ready(out)

    assert out.shape == (B, T, EMBED)
    assert jnp.allclose(out, ref, rtol=2e-3, atol=2e-3), "mismatch vs reference"

    print("KERNEL_OK")
</pallas_src>

<mosaic_0001>
module attributes {stable_mosaic.version = 11 : i64} {
  func.func @_attention_block_kernel(%arg0: memref<16x32xf32, #tpu.memory_space<vmem>>, %arg1: memref<32x192xf32, #tpu.memory_space<vmem>>, %arg2: memref<64x32xf32, #tpu.memory_space<vmem>>, %arg3: memref<8x96xf32, #tpu.memory_space<vmem>>, %arg4: memref<16x32xf32, #tpu.memory_space<vmem>>) attributes {dimension_semantics = [], scalar_prefetch = 0 : i64, scratch_operands = 0 : i64, tpu.core_type = #tpu.core_type<tc>} {
    %c0 = arith.constant 0 : index
    %c0_0 = arith.constant 0 : index
    %0 = vector.load %arg0[%c0, %c0_0] : memref<16x32xf32, #tpu.memory_space<vmem>>, vector<16x32xf32>
    %c0_1 = arith.constant 0 : index
    %c0_2 = arith.constant 0 : index
    %1 = vector.load %arg1[%c0_1, %c0_2] : memref<32x192xf32, #tpu.memory_space<vmem>>, vector<32x192xf32>
    %c0_3 = arith.constant 0 : index
    %c0_4 = arith.constant 0 : index
    %2 = vector.load %arg3[%c0_3, %c0_4] : memref<8x96xf32, #tpu.memory_space<vmem>>, vector<8x96xf32>
    %3 = vector.extract_strided_slice %2 {offsets = [0, 0], sizes = [1, 32], strides = [1, 1]} : vector<8x96xf32> to vector<1x32xf32>
    %4 = vector.extract_strided_slice %2 {offsets = [1, 0], sizes = [1, 32], strides = [1, 1]} : vector<8x96xf32> to vector<1x32xf32>
    %5 = vector.extract_strided_slice %2 {offsets = [2, 0], sizes = [1, 96], strides = [1, 1]} : vector<8x96xf32> to vector<1x96xf32>
    %6 = vector.extract_strided_slice %2 {offsets = [3, 0], sizes = [1, 32], strides = [1, 1]} : vector<8x96xf32> to vector<1x32xf32>
    %7 = vector.extract_strided_slice %2 {offsets = [4, 0], sizes = [1, 32], strides = [1, 1]} : vector<8x96xf32> to vector<1x32xf32>
    %8 = vector.extract_strided_slice %2 {offsets = [5, 0], sizes = [1, 32], strides = [1, 1]} : vector<8x96xf32> to vector<1x32xf32>
    %9 = vector.extract_strided_slice %2 {offsets = [6, 0], sizes = [1, 64], strides = [1, 1]} : vector<8x96xf32> to vector<1x64xf32>
    %10 = vector.extract_strided_slice %2 {offsets = [7, 0], sizes = [1, 32], strides = [1, 1]} : vector<8x96xf32> to vector<1x32xf32>
    %11 = vector.extract_strided_slice %1 {offsets = [0, 0], sizes = [32, 96], strides = [1, 1]} : vector<32x192xf32> to vector<32x96xf32>
    %12 = vector.extract_strided_slice %1 {offsets = [0, 96], sizes = [32, 32], strides = [1, 1]} : vector<32x192xf32> to vector<32x32xf32>
    %13 = vector.extract_strided_slice %1 {offsets = [0, 128], sizes = [32, 64], strides = [1, 1]} : vector<32x192xf32> to vector<32x64xf32>
    %cst = arith.constant dense<0.000000e+00> : vector<16xf32>
    %14 = vector.multi_reduction <add>, %0, %cst [1] : vector<16x32xf32> to vector<16xf32>
    %15 = vector.shape_cast %14 : vector<16xf32> to vector<16x1xf32>
    %cst_5 = arith.constant 3.200000e+01 : f32
    %16 = vector.broadcast %cst_5 : f32 to vector<16x1xf32>
    %17 = arith.divf %15, %16 : vector<16x1xf32>
    %18 = vector.broadcast %17 : vector<16x1xf32> to vector<16x32xf32>
    %19 = arith.subf %0, %18 : vector<16x32xf32>
    %20 = arith.mulf %19, %19 : vector<16x32xf32>
    %cst_6 = arith.constant dense<0.000000e+00> : vector<16xf32>
    %21 = vector.multi_reduction <add>, %20, %cst_6 [1] : vector<16x32xf32> to vector<16xf32>
    %22 = vector.shape_cast %21 : vector<16xf32> to vector<16x1xf32>
    %cst_7 = arith.constant 3.200000e+01 : f32
    %23 = vector.broadcast %cst_7 : f32 to vector<16x1xf32>
    %24 = arith.divf %22, %23 : vector<16x1xf32>
    %25 = vector.broadcast %17 : vector<16x1xf32> to vector<16x32xf32>
    %26 = arith.subf %0, %25 : vector<16x32xf32>
    %cst_8 = arith.constant 9.99999974E-6 : f32
    %27 = vector.broadcast %cst_8 : f32 to vector<16x1xf32>
    %28 = arith.addf %24, %27 : vector<16x1xf32>
    %29 = math.rsqrt %28 : vector<16x1xf32>
    %30 = vector.broadcast %29 : vector<16x1xf32> to vector<16x32xf32>
    %31 = arith.mulf %26, %30 : vector<16x32xf32>
    %32 = vector.broadcast %3 : vector<1x32xf32> to vector<16x32xf32>
    %33 = arith.mulf %31, %32 : vector<16x32xf32>
    %34 = vector.broadcast %4 : vector<1x32xf32> to vector<16x32xf32>
    %35 = arith.addf %33, %34 : vector<16x32xf32>
    %cst_9 = arith.constant dense<0.000000e+00> : vector<16x96xf32>
    %36 = tpu.matmul %35, %11, %cst_9 {dimension_numbers = #tpu.dot_dimension_numbers<[1], [0], [0], [1], [0, 0, 1, 1], [], []>} : vector<16x32xf32>, vector<32x96xf32>, vector<16x96xf32> -> vector<16x96xf32>
    %37 = vector.broadcast %5 : vector<1x96xf32> to vector<16x96xf32>
    %38 = arith.addf %36, %37 : vector<16x96xf32>
    %39 = vector.extract_strided_slice %38 {offsets = [0, 0], sizes = [16, 8], strides = [1, 1]} : vector<16x96xf32> to vector<16x8xf32>
    %40 = vector.shape_cast %39 : vector<16x8xf32> to vector<2x8x8xf32>
    %41 = vector.extract_strided_slice %38 {offsets = [0, 32], sizes = [16, 8], strides = [1, 1]} : vector<16x96xf32> to vector<16x8xf32>
    %42 = vector.shape_cast %41 : vector<16x8xf32> to vector<2x8x8xf32>
    %43 = vector.extract_strided_slice %38 {offsets = [0, 64], sizes = [16, 8], strides = [1, 1]} : vector<16x96xf32> to vector<16x8xf32>
    %44 = vector.shape_cast %43 : vector<16x8xf32> to vector<2x8x8xf32>
    "tpu.trace_start"() <{level = 10 : i32, message = "bqd,bkd->bqk"}> : () -> ()
    %cst_10 = arith.constant dense<0.000000e+00> : vector<2x8x8xf32>
    %45 = tpu.matmul %40, %42, %cst_10 {dimension_numbers = #tpu.dot_dimension_numbers<[2], [2], [1], [1], [0, 0, 0, 1, 1, 1], [0], [0]>} : vector<2x8x8xf32>, vector<2x8x8xf32>, vector<2x8x8xf32> -> vector<2x8x8xf32>
    "tpu.trace_stop"() : () -> ()
    %cst_11 = arith.constant dense<0xFF800000> : vector<2x8xf32>
    %46 = vector.multi_reduction <maximumf>, %45, %cst_11 [2] : vector<2x8x8xf32> to vector<2x8xf32>
    %47 = vector.shape_cast %46 : vector<2x8xf32> to vector<2x8x1xf32>
    %48 = vector.broadcast %47 : vector<2x8x1xf32> to vector<2x8x8xf32>
    %49 = arith.subf %45, %48 : vector<2x8x8xf32>
    %50 = math.exp %49 : vector<2x8x8xf32>
    %cst_12 = arith.constant dense<0.000000e+00> : vector<2x8xf32>
    %51 = vector.multi_reduction <add>, %50, %cst_12 [2] : vector<2x8x8xf32> to vector<2x8xf32>
    %52 = vector.shape_cast %51 : vector<2x8xf32> to vector<2x8x1xf32>
    %53 = tpu.reciprocal %52 {approx = true} : vector<2x8x1xf32> -> vector<2x8x1xf32>
    %54 = vector.broadcast %53 : vector<2x8x1xf32> to vector<2x8x8xf32>
    %55 = arith.mulf %50, %54 : vector<2x8x8xf32>
    "tpu.trace_start"() <{level = 10 : i32, message = "bqk,bkd->bqd"}> : () -> ()
    %cst_13 = arith.constant dense<0.000000e+00> : vector<2x8x8xf32>
    %56 = tpu.matmul %55, %44, %cst_13 {dimension_numbers = #tpu.dot_dimension_numbers<[2], [1], [1], [2], [0, 0, 0, 1, 1, 2], [0], [0]>} : vector<2x8x8xf32>, vector<2x8x8xf32>, vector<2x8x8xf32> -> vector<2x8x8xf32>
    "tpu.trace_stop"() : () -> ()
    %57 = vector.shape_cast %56 : vector<2x8x8xf32> to vector<16x8xf32>
    %58 = vector.extract_strided_slice %38 {offsets = [0, 8], sizes = [16, 8], strides = [1, 1]} : vector<16x96xf32> to vector<16x8xf32>
    %59 = vector.shape_cast %58 : vector<16x8xf32> to vector<2x8x8xf32>
    %60 = vector.extract_strided_slice %38 {offsets = [0, 40], sizes = [16, 8], strides = [1, 1]} : vector<16x96xf32> to vector<16x8xf32>
    %61 = vector.shape_cast %60 : vector<16x8xf32> to vector<2x8x8xf32>
    %62 = vector.extract_strided_slice %38 {offsets = [0, 72], sizes = [16, 8], strides = [1, 1]} : vector<16x96xf32> to vector<16x8xf32>
    %63 = vector.shape_cast %62 : vector<16x8xf32> to vector<2x8x8xf32>
    "tpu.trace_start"() <{level = 10 : i32, message = "bqd,bkd->bqk"}> : () -> ()
    %cst_14 = arith.constant dense<0.000000e+00> : vector<2x8x8xf32>
    %64 = tpu.matmul %59, %61, %cst_14 {dimension_numbers = #tpu.dot_dimension_numbers<[2], [2], [1], [1], [0, 0, 0, 1, 1, 1], [0], [0]>} : vector<2x8x8xf32>, vector<2x8x8xf32>, vector<2x8x8xf32> -> vector<2x8x8xf32>
    "tpu.trace_stop"() : () -> ()
    %cst_15 = arith.constant dense<0xFF800000> : vector<2x8xf32>
    %65 = vector.multi_reduction <maximumf>, %64, %cst_15 [2] : vector<2x8x8xf32> to vector<2x8xf32>
    %66 = vector.shape_cast %65 : vector<2x8xf32> to vector<2x8x1xf32>
    %67 = vector.broadcast %66 : vector<2x8x1xf32> to vector<2x8x8xf32>
    %68 = arith.subf %64, %67 : vector<2x8x8xf32>
    %69 = math.exp %68 : vector<2x8x8xf32>
    %cst_16 = arith.constant dense<0.000000e+00> : vector<2x8xf32>
    %70 = vector.multi_reduction <add>, %69, %cst_16 [2] : vector<2x8x8xf32> to vector<2x8xf32>
    %71 = vector.shape_cast %70 : vector<2x8xf32> to vector<2x8x1xf32>
    %72 = tpu.reciprocal %71 {approx = true} : vector<2x8x1xf32> -> vector<2x8x1xf32>
    %73 = vector.broadcast %72 : vector<2x8x1xf32> to vector<2x8x8xf32>
    %74 = arith.mulf %69, %73 : vector<2x8x8xf32>
    "tpu.trace_start"() <{level = 10 : i32, message = "bqk,bkd->bqd"}> : () -> ()
    %cst_17 = arith.constant dense<0.000000e+00> : vector<2x8x8xf32>
    %75 = tpu.matmul %74, %63, %cst_17 {dimension_numbers = #tpu.dot_dimension_numbers<[2], [1], [1], [2], [0, 0, 0, 1, 1, 2], [0], [0]>} : vector<2x8x8xf32>, vector<2x8x8xf32>, vector<2x8x8xf32> -> vector<2x8x8xf32>
    "tpu.trace_stop"() : () -> ()
    %76 = vector.shape_cast %75 : vector<2x8x8xf32> to vector<16x8xf32>
    %77 = vector.extract_strided_slice %38 {offsets = [0, 16], sizes = [16, 8], strides = [1, 1]} : vector<16x96xf32> to vector<16x8xf32>
    %78 = vector.shape_cast %77 : vector<16x8xf32> to vector<2x8x8xf32>
    %79 = vector.extract_strided_slice %38 {offsets = [0, 48], sizes = [16, 8], strides = [1, 1]} : vector<16x96xf32> to vector<16x8xf32>
    %80 = vector.shape_cast %79 : vector<16x8xf32> to vector<2x8x8xf32>
    %81 = vector.extract_strided_slice %38 {offsets = [0, 80], sizes = [16, 8], strides = [1, 1]} : vector<16x96xf32> to vector<16x8xf32>
    %82 = vector.shape_cast %81 : vector<16x8xf32> to vector<2x8x8xf32>
    "tpu.trace_start"() <{level = 10 : i32, message = "bqd,bkd->bqk"}> : () -> ()
    %cst_18 = arith.constant dense<0.000000e+00> : vector<2x8x8xf32>
    %83 = tpu.matmul %78, %80, %cst_18 {dimension_numbers = #tpu.dot_dimension_numbers<[2], [2], [1], [1], [0, 0, 0, 1, 1, 1], [0], [0]>} : vector<2x8x8xf32>, vector<2x8x8xf32>, vector<2x8x8xf32> -> vector<2x8x8xf32>
    "tpu.trace_stop"() : () -> ()
    %cst_19 = arith.constant dense<0xFF800000> : vector<2x8xf32>
    %84 = vector.multi_reduction <maximumf>, %83, %cst_19 [2] : vector<2x8x8xf32> to vector<2x8xf32>
    %85 = vector.shape_cast %84 : vector<2x8xf32> to vector<2x8x1xf32>
    %86 = vector.broadcast %85 : vector<2x8x1xf32> to vector<2x8x8xf32>
    %87 = arith.subf %83, %86 : vector<2x8x8xf32>
    %88 = math.exp %87 : vector<2x8x8xf32>
    %cst_20 = arith.constant dense<0.000000e+00> : vector<2x8xf32>
    %89 = vector.multi_reduction <add>, %88, %cst_20 [2] : vector<2x8x8xf32> to vector<2x8xf32>
    %90 = vector.shape_cast %89 : vector<2x8xf32> to vector<2x8x1xf32>
    %91 = tpu.reciprocal %90 {approx = true} : vector<2x8x1xf32> -> vector<2x8x1xf32>
    %92 = vector.broadcast %91 : vector<2x8x1xf32> to vector<2x8x8xf32>
    %93 = arith.mulf %88, %92 : vector<2x8x8xf32>
    "tpu.trace_start"() <{level = 10 : i32, message = "bqk,bkd->bqd"}> : () -> ()
    %cst_21 = arith.constant dense<0.000000e+00> : vector<2x8x8xf32>
    %94 = tpu.matmul %93, %82, %cst_21 {dimension_numbers = #tpu.dot_dimension_numbers<[2], [1], [1], [2], [0, 0, 0, 1, 1, 2], [0], [0]>} : vector<2x8x8xf32>, vector<2x8x8xf32>, vector<2x8x8xf32> -> vector<2x8x8xf32>
    "tpu.trace_stop"() : () -> ()
    %95 = vector.shape_cast %94 : vector<2x8x8xf32> to vector<16x8xf32>
    %96 = vector.extract_strided_slice %38 {offsets = [0, 24], sizes = [16, 8], strides = [1, 1]} : vector<16x96xf32> to vector<16x8xf32>
    %97 = vector.shape_cast %96 : vector<16x8xf32> to vector<2x8x8xf32>
    %98 = vector.extract_strided_slice %38 {offsets = [0, 56], sizes = [16, 8], strides = [1, 1]} : vector<16x96xf32> to vector<16x8xf32>
    %99 = vector.shape_cast %98 : vector<16x8xf32> to vector<2x8x8xf32>
    %100 = vector.extract_strided_slice %38 {offsets = [0, 88], sizes = [16, 8], strides = [1, 1]} : vector<16x96xf32> to vector<16x8xf32>
    %101 = vector.shape_cast %100 : vector<16x8xf32> to vector<2x8x8xf32>
    "tpu.trace_start"() <{level = 10 : i32, message = "bqd,bkd->bqk"}> : () -> ()
    %cst_22 = arith.constant dense<0.000000e+00> : vector<2x8x8xf32>
    %102 = tpu.matmul %97, %99, %cst_22 {dimension_numbers = #tpu.dot_dimension_numbers<[2], [2], [1], [1], [0, 0, 0, 1, 1, 1], [0], [0]>} : vector<2x8x8xf32>, vector<2x8x8xf32>, vector<2x8x8xf32> -> vector<2x8x8xf32>
    "tpu.trace_stop"() : () -> ()
    %cst_23 = arith.constant dense<0xFF800000> : vector<2x8xf32>
    %103 = vector.multi_reduction <maximumf>, %102, %cst_23 [2] : vector<2x8x8xf32> to vector<2x8xf32>
    %104 = vector.shape_cast %103 : vector<2x8xf32> to vector<2x8x1xf32>
    %105 = vector.broadcast %104 : vector<2x8x1xf32> to vector<2x8x8xf32>
    %106 = arith.subf %102, %105 : vector<2x8x8xf32>
    %107 = math.exp %106 : vector<2x8x8xf32>
    %cst_24 = arith.constant dense<0.000000e+00> : vector<2x8xf32>
    %108 = vector.multi_reduction <add>, %107, %cst_24 [2] : vector<2x8x8xf32> to vector<2x8xf32>
    %109 = vector.shape_cast %108 : vector<2x8xf32> to vector<2x8x1xf32>
    %110 = tpu.reciprocal %109 {approx = true} : vector<2x8x1xf32> -> vector<2x8x1xf32>
    %111 = vector.broadcast %110 : vector<2x8x1xf32> to vector<2x8x8xf32>
    %112 = arith.mulf %107, %111 : vector<2x8x8xf32>
    "tpu.trace_start"() <{level = 10 : i32, message = "bqk,bkd->bqd"}> : () -> ()
    %cst_25 = arith.constant dense<0.000000e+00> : vector<2x8x8xf32>
    %113 = tpu.matmul %112, %101, %cst_25 {dimension_numbers = #tpu.dot_dimension_numbers<[2], [1], [1], [2], [0, 0, 0, 1, 1, 2], [0], [0]>} : vector<2x8x8xf32>, vector<2x8x8xf32>, vector<2x8x8xf32> -> vector<2x8x8xf32>
    "tpu.trace_stop"() : () -> ()
    %114 = vector.shape_cast %113 : vector<2x8x8xf32> to vector<16x8xf32>
    %115 = tpu.concatenate %57, %76, %95, %114 in 1 : vector<16x8xf32>, vector<16x8xf32>, vector<16x8xf32>, vector<16x8xf32> -> vector<16x32xf32>
    %cst_26 = arith.constant dense<0.000000e+00> : vector<16x32xf32>
    %116 = tpu.matmul %115, %12, %cst_26 {dimension_numbers = #tpu.dot_dimension_numbers<[1], [0], [0], [1], [0, 0, 1, 1], [], []>} : vector<16x32xf32>, vector<32x32xf32>, vector<16x32xf32> -> vector<16x32xf32>
    %117 = vector.broadcast %6 : vector<1x32xf32> to vector<16x32xf32>
    %118 = arith.addf %116, %117 : vector<16x32xf32>
    %119 = arith.addf %0, %118 : vector<16x32xf32>
    %cst_27 = arith.constant dense<0.000000e+00> : vector<16xf32>
    %120 = vector.multi_reduction <add>, %119, %cst_27 [1] : vector<16x32xf32> to vector<16xf32>
    %121 = vector.shape_cast %120 : vector<16xf32> to vector<16x1xf32>
    %cst_28 = arith.constant 3.200000e+01 : f32
    %122 = vector.broadcast %cst_28 : f32 to vector<16x1xf32>
    %123 = arith.divf %121, %122 : vector<16x1xf32>
    %124 = vector.broadcast %123 : vector<16x1xf32> to vector<16x32xf32>
    %125 = arith.subf %119, %124 : vector<16x32xf32>
    %126 = arith.mulf %125, %125 : vector<16x32xf32>
    %cst_29 = arith.constant dense<0.000000e+00> : vector<16xf32>
    %127 = vector.multi_reduction <add>, %126, %cst_29 [1] : vector<16x32xf32> to vector<16xf32>
    %128 = vector.shape_cast %127 : vector<16xf32> to vector<16x1xf32>
    %cst_30 = arith.constant 3.200000e+01 : f32
    %129 = vector.broadcast %cst_30 : f32 to vector<16x1xf32>
    %130 = arith.divf %128, %129 : vector<16x1xf32>
    %131 = vector.broadcast %123 : vector<16x1xf32> to vector<16x32xf32>
    %132 = arith.subf %119, %131 : vector<16x32xf32>
    %cst_31 = arith.constant 9.99999974E-6 : f32
    %133 = vector.broadcast %cst_31 : f32 to vector<16x1xf32>
    %134 = arith.addf %130, %133 : vector<16x1xf32>
    %135 = math.rsqrt %134 : vector<16x1xf32>
    %136 = vector.broadcast %135 : vector<16x1xf32> to vector<16x32xf32>
    %137 = arith.mulf %132, %136 : vector<16x32xf32>
    %138 = vector.broadcast %7 : vector<1x32xf32> to vector<16x32xf32>
    %139 = arith.mulf %137, %138 : vector<16x32xf32>
    %140 = vector.broadcast %8 : vector<1x32xf32> to vector<16x32xf32>
    %141 = arith.addf %139, %140 : vector<16x32xf32>
    %cst_32 = arith.constant dense<0.000000e+00> : vector<16x64xf32>
    %142 = tpu.matmul %141, %13, %cst_32 {dimension_numbers = #tpu.dot_dimension_numbers<[1], [0], [0], [1], [0, 0, 1, 1], [], []>} : vector<16x32xf32>, vector<32x64xf32>, vector<16x64xf32> -> vector<16x64xf32>
    %143 = vector.broadcast %9 : vector<1x64xf32> to vector<16x64xf32>
    %144 = arith.addf %142, %143 : vector<16x64xf32>
    %cst_33 = arith.constant 5.000000e-01 : f32
    %145 = vector.broadcast %cst_33 : f32 to vector<16x64xf32>
    %146 = arith.mulf %145, %144 : vector<16x64xf32>
    %cst_34 = arith.constant 0.707106769 : f32
    %147 = vector.broadcast %cst_34 : f32 to vector<16x64xf32>
    %148 = arith.mulf %144, %147 : vector<16x64xf32>
    %149 = math.erf %148 : vector<16x64xf32>
    %cst_35 = arith.constant 1.000000e+00 : f32
    %150 = vector.broadcast %cst_35 : f32 to vector<16x64xf32>
    %151 = arith.addf %150, %149 : vector<16x64xf32>
    %152 = arith.mulf %146, %151 : vector<16x64xf32>
    %c0_36 = arith.constant 0 : index
    %c0_37 = arith.constant 0 : index
    %153 = vector.load %arg2[%c0_36, %c0_37] : memref<64x32xf32, #tpu.memory_space<vmem>>, vector<64x32xf32>
    %cst_38 = arith.constant dense<0.000000e+00> : vector<16x32xf32>
    %154 = tpu.matmul %152, %153, %cst_38 {dimension_numbers = #tpu.dot_dimension_numbers<[1], [0], [0], [1], [0, 0, 1, 1], [], []>} : vector<16x64xf32>, vector<64x32xf32>, vector<16x32xf32> -> vector<16x32xf32>
    %155 = vector.broadcast %10 : vector<1x32xf32> to vector<16x32xf32>
    %156 = arith.addf %154, %155 : vector<16x32xf32>
    %157 = arith.addf %119, %156 : vector<16x32xf32>
    %c0_39 = arith.constant 0 : index
    %c0_40 = arith.constant 0 : index
    %158 = vector.load %arg4[%c0_39, %c0_40] : memref<16x32xf32, #tpu.memory_space<vmem>>, vector<16x32xf32>
    tpu.vector_store %arg4[%c0_39, %c0_40], %157 {strides = array<i32>} : memref<16x32xf32, #tpu.memory_space<vmem>>, vector<16x32xf32>,
    return
  }
}

</mosaic_0001>

<llo_original>
// kernel: attention_block.1
$region0: #{attention_block.1}
  #allocation0 [shape = 'u32[]', space=smem, size = 0x4, offset = 0x4, fixed_abs, tag = 'smem constant byte address 0x4 - core index']
  #allocation1 [shape = 'u32[144,128]{1,0:T(1,128)}', space=vmem, size = 0x12000, scoped, tag = 'internal scratch']
  %s0 = inlined_call_operand.vmem [shape: f32[16,32], index: 0, kind: input, shape index: {}, may-alias: {0,4}]
  %s1 = inlined_call_operand.vmem [shape: f32[32,192], index: 1, kind: input, shape index: {}]
  %s2 = inlined_call_operand.vmem [shape: f32[64,32], index: 2, kind: input, shape index: {}]
  %s3 = inlined_call_operand.vmem [shape: f32[8,96], index: 3, kind: input, shape index: {}]
  %s4 = inlined_call_operand.vmem [shape: f32[16,32], index: 4, kind: output, shape index: {}, may-alias: {0,4}]
  %s5 = sld [smem:[#allocation0]]
  $region26: #{attention_block.1} parent=0
    _
  %s7 = ssub.s32 1, %s5
  %s8 = scalar_select 0, %s7, %s5
  // Predicated region
  $region2: #{attention_block.1} parent=0 // pred_check
    _
  $region3: #{attention_block.1} parent=0 // pred_check_branch
    %10 = sbr.rel (0) target = $region5
  $region4: #{attention_block.1} parent=0 // pred_region
    _
  $region5: #{attention_block.1} parent=0 // pred_fallthru
    _
  // Predicated region
  $region6: #{attention_block.1} parent=0 // pred_check
    _
  $region7: #{attention_block.1} parent=0 // pred_check_branch
    %12 = sbr.rel (0) target = $region9
  $region8: #{attention_block.1} parent=0 // pred_region
    _
  $region9: #{attention_block.1} parent=0 // pred_fallthru
    _
  // Predicated region
  $region10: #{attention_block.1} parent=0 // pred_check
    _
  $region11: #{attention_block.1} parent=0 // pred_check_branch
    %14 = sbr.rel (0) target = $region13
  $region12: #{attention_block.1} parent=0 // pred_region
    _
  $region13: #{attention_block.1} parent=0 // pred_fallthru
    _
  // Predicated region
  $region14: #{attention_block.1} parent=0 // pred_check
    _
  $region15: #{attention_block.1} parent=0 // pred_check_branch
    %16 = sbr.rel (0) target = $region17
  $region16: #{attention_block.1} parent=0 // pred_region
    _
  $region17: #{attention_block.1} parent=0 // pred_fallthru
    _
  %v17 = vld [vmem:[%s0] sm:$0xff]
  %v18 = vld [vmem:[%s0 + $0x8] sm:$0xff]
  %v19 = vld [vmem:[%s1] sm:$0xff]
  %v20 = vld [vmem:[%s1 + $0x8] sm:$0xff]
  %v21 = vld [vmem:[%s1 + $0x10] sm:$0xff]
  %v22 = vld [vmem:[%s1 + $0x18] sm:$0xff]
  %v23 = vld [vmem:[%s1 + $0x20] sm:$0xff]
  %v24 = vld [vmem:[%s1 + $0x28] sm:$0xff]
  %v25 = vld [vmem:[%s1 + $0x30] sm:$0xff]
  %v26 = vld [vmem:[%s1 + $0x38] sm:$0xff]
  %v27 = vld [vmem:[%s3] sm:$0xff]
  %vm28 = vcmask 261120
  %v29 = vsel %vm28, %v17, 0.0
  %30 = vadd.xlane.f32.xlu0 %v29
  %v31 = vpop.xlane.xlu0 %30
  %v32 = vsel %vm28, %v18, 0.0
  %33 = vadd.xlane.f32.xlu0 %v32
  %v34 = vpop.xlane.xlu0 %33
  %v35 = vrcp.pop 32.0
  %v36 = vmul.f32 %v31, %v35
  %v37 = vmul.f32 %v34, %v35
  %v38 = vsub.f32 %v17, %v36
  %v39 = vsub.f32 %v18, %v37
  %v40 = vmul.f32 %v38, %v38
  %v41 = vmul.f32 %v39, %v39
  %v42 = vsel %vm28, %v40, 0.0
  %43 = vadd.xlane.f32.xlu0 %v42
  %v44 = vpop.xlane.xlu0 %43
  %v45 = vsel %vm28, %v41, 0.0
  %46 = vadd.xlane.f32.xlu0 %v45
  %v47 = vpop.xlane.xlu0 %46
  %v48 = vmul.f32 %v44, %v35
  %v49 = vmul.f32 %v47, %v35
  %v50 = vadd.f32 %v48, 1e-05
  %v51 = vadd.f32 %v49, 1e-05
  %v52 = vrsqrt.pop %v50
  %v53 = vrsqrt.pop %v51
  %v54 = vmul.f32 %v38, %v52
  %v55 = vmul.f32 %v39, %v53
  %v56 = vlaneseq
  %v57 = vshrl.u32 %v56, 7
  %v58 = vsub.s32 0, %v57
  %v59 = vrot.slane %v27, %v58
  %v60 = vmul.f32 %v54, %v59
  %v61 = vmul.f32 %v55, %v59
  %v62 = vlaneseq
  %v63 = vshrl.u32 %v62, 7
  %v64 = vsub.s32 1, %v63
  %v65 = vrot.slane %v27, %v64
  %v66 = vadd.f32 %v60, %v65
  %v67 = vadd.f32 %v61, %v65
  %v68 = vlaneseq
  %v69 = vshrl.u32 %v68, 7
  %v70 = vsub.s32 2, %v69
  %v71 = vrot.slane %v27, %v70
  %v73 = vsel %vm28, %v66, 0
  %v76 = vsel %vm28, %v67, 0
  %78 = vmatprep.subr.mxu0 0.0
  %79 = vmatpush1.msra.mxu0 %v19
  %80 = vmatprep.subr.mxu0 0.0
  %81 = vmatpush1.msra.mxu0 %v21
  %82 = vmatprep.subr.mxu0 0.0
  %83 = vmatpush1.msra.mxu0 %v23
  %84 = vmatprep.subr.mxu0 0.0
  %85 = vmatpush1.msra.mxu0 %v25
  %86 = vmatprep.subr.mxu0 0.0
  %87 = vmatpush1.msra.mxu0 0.0
  %88 = vmatprep.subr.mxu0 0.0
  %89 = vmatpush1.msra.mxu0 0.0
  %90 = vmatprep.subr.mxu0 0.0
  %91 = vmatpush1.msra.mxu0 0.0
  %92 = vmatprep.subr.mxu0 0.0
  %93 = vmatpush1.msra.mxu0 0.0
  %94 = vmatprep.subr.mxu0 0.0
  %95 = vmatpush1.msra.mxu0 0.0
  %96 = vmatprep.subr.mxu0 0.0
  %97 = vmatpush1.msra.mxu0 0.0
  %98 = vmatprep.subr.mxu0 0.0
  %99 = vmatpush1.msra.mxu0 0.0
  %100 = vmatprep.subr.mxu0 0.0
  %101 = vmatpush1.msra.mxu0 0.0
  %102 = vmatprep.subr.mxu0 0.0
  %103 = vmatpush1.msra.mxu0 0.0
  %104 = vmatprep.subr.mxu0 0.0
  %105 = vmatpush1.msra.mxu0 0.0
  %106 = vmatprep.subr.mxu0 0.0
  %107 = vmatpush1.msra.mxu0 0.0
  %108 = vmatprep.subr.mxu0 0.0
  %109 = vmatpush1.msra.mxu0 0.0
  %110 = vmatprep.subr.mxu0 0.0
  %111 = vmatpush1.msra.mxu0 0.0
  %112 = vmatprep.subr.mxu0 0.0
  %113 = vmatpush1.msra.mxu0 0.0
  %114 = vmatprep.subr.mxu0 0.0
  %115 = vmatpush1.msra.mxu0 0.0
  %116 = vmatprep.subr.mxu0 0.0
  %117 = vmatpush1.msra.mxu0 0.0
  %118 = vmatprep.subr.mxu0 0.0
  %119 = vmatpush1.msra.mxu0 0.0
  %120 = vmatprep.subr.mxu0 0.0
  %121 = vmatpush1.msra.mxu0 0.0
  %122 = vmatprep.subr.mxu0 0.0
  %123 = vmatpush1.msra.mxu0 0.0
  %124 = vmatprep.subr.mxu0 0.0
  %125 = vmatpush1.msra.mxu0 0.0
  %126 = vmatprep.subr.mxu0 0.0
  %127 = vmatpush1.msra.mxu0 0.0
  %128 = vmatprep.subr.mxu0 0.0
  %129 = vmatpush1.msra.mxu0 0.0
  %130 = vmatprep.subr.mxu0 0.0
  %131 = vmatpush1.msra.mxu0 0.0
  %132 = vmatprep.subr.mxu0 0.0
  %133 = vmatpush1.msra.mxu0 0.0
  %134 = vmatprep.subr.mxu0 0.0
  %135 = vmatpush1.msra.mxu0 0.0
  %136 = vmatprep.subr.mxu0 0.0
  %137 = vmatpush1.msra.mxu0 0.0
  %138 = vmatprep.subr.mxu0 0.0
  %139 = vmatpush1.msra.mxu0 0.0
  %140 = vmatprep.subr.mxu0 0.0
  %141 = vmatpush1.msra.mxu0 0.0
  %142 = vmatprep.mubr.f32.mxu0 0.0
  %143 = vmatmul.mubr.f32.gmra.mrb[0].mxu0 %v73
  %v144 = vpop.f32.mrb[0].mxu0
  %v145 = vadd.f32 %v71, %v144
  %v146 = vpop.f32.mrb[0].mxu0
  %147 = vmatprep.mubr.f32.mxu0 0.0
  %148 = vmatmul.mubr.f32.gmra.mrb[0].mxu0 %v76
  %v149 = vpop.f32.mrb[0].mxu0
  %v150 = vadd.f32 %v71, %v149
  %v151 = vpop.f32.mrb[0].mxu0
  %152 = vdwg.mxu0
  %154 = vrot.lane.b32.xlu0 %v145, 96
  %v155 = vpop.permute.xlu0 %154
  %vm156 = vcmask 64512
  %v157 = vsel %vm156, %v145, 0
  %v159 = vsel %vm156, %v155, 0
  %161 = vmatprep.subr.mxu0 0.0
  %162 = vmatpush1.xpose.msra.mxu0 %v159
  %163 = vmatprep.subr.mxu0 0.0
  %164 = vmatpush1.xpose.msra.mxu0 0.0
  %165 = vmatprep.subr.mxu0 0.0
  %166 = vmatpush1.xpose.msra.mxu0 0.0
  %167 = vmatprep.subr.mxu0 0.0
  %168 = vmatpush1.xpose.msra.mxu0 0.0
  %169 = vmatprep.subr.mxu0 0.0
  %170 = vmatpush1.xpose.msra.mxu0 0.0
  %171 = vmatprep.subr.mxu0 0.0
  %172 = vmatpush1.xpose.msra.mxu0 0.0
  %173 = vmatprep.subr.mxu0 0.0
  %174 = vmatpush1.xpose.msra.mxu0 0.0
  %175 = vmatprep.subr.mxu0 0.0
  %176 = vmatpush1.xpose.msra.mxu0 0.0
  %177 = vmatprep.subr.mxu0 0.0
  %178 = vmatpush1.xpose.msra.mxu0 0.0
  %179 = vmatprep.subr.mxu0 0.0
  %180 = vmatpush1.xpose.msra.mxu0 0.0
  %181 = vmatprep.subr.mxu0 0.0
  %182 = vmatpush1.xpose.msra.mxu0 0.0
  %183 = vmatprep.subr.mxu0 0.0
  %184 = vmatpush1.xpose.msra.mxu0 0.0
  %185 = vmatprep.subr.mxu0 0.0
  %186 = vmatpush1.xpose.msra.mxu0 0.0
  %187 = vmatprep.subr.mxu0 0.0
  %188 = vmatpush1.xpose.msra.mxu0 0.0
  %189 = vmatprep.subr.mxu0 0.0
  %190 = vmatpush1.xpose.msra.mxu0 0.0
  %191 = vmatprep.subr.mxu0 0.0
  %192 = vmatpush1.xpose.msra.mxu0 0.0
  %193 = vmatprep.subr.mxu0 0.0
  %194 = vmatpush1.xpose.msra.mxu0 0.0
  %195 = vmatprep.subr.mxu0 0.0
  %196 = vmatpush1.xpose.msra.mxu0 0.0
  %197 = vmatprep.subr.mxu0 0.0
  %198 = vmatpush1.xpose.msra.mxu0 0.0
  %199 = vmatprep.subr.mxu0 0.0
  %200 = vmatpush1.xpose.msra.mxu0 0.0
  %201 = vmatprep.subr.mxu0 0.0
  %202 = vmatpush1.xpose.msra.mxu0 0.0
  %203 = vmatprep.subr.mxu0 0.0
  %204 = vmatpush1.xpose.msra.mxu0 0.0
  %205 = vmatprep.subr.mxu0 0.0
  %206 = vmatpush1.xpose.msra.mxu0 0.0
  %207 = vmatprep.subr.mxu0 0.0
  %208 = vmatpush1.xpose.msra.mxu0 0.0
  %209 = vmatprep.subr.mxu0 0.0
  %210 = vmatpush1.xpose.msra.mxu0 0.0
  %211 = vmatprep.subr.mxu0 0.0
  %212 = vmatpush1.xpose.msra.mxu0 0.0
  %213 = vmatprep.subr.mxu0 0.0
  %214 = vmatpush1.xpose.msra.mxu0 0.0
  %215 = vmatprep.subr.mxu0 0.0
  %216 = vmatpush1.xpose.msra.mxu0 0.0
  %217 = vmatprep.subr.mxu0 0.0
  %218 = vmatpush1.xpose.msra.mxu0 0.0
  %219 = vmatprep.subr.mxu0 0.0
  %220 = vmatpush1.xpose.msra.mxu0 0.0
  %221 = vmatprep.subr.mxu0 0.0
  %222 = vmatpush1.xpose.msra.mxu0 0.0
  %223 = vmatprep.subr.mxu0 0.0
  %224 = vmatpush1.xpose.msra.mxu0 0.0
  %225 = vmatprep.mubr.f32.mxu0 0.0
  %226 = vmatmul.mubr.f32.gmra.mrb[0].mxu0 %v157
  %v227 = vpop.f32.mrb[0].mxu0
  %v228 = vadd.f32 0.0, %v227
  %v229 = vpop.f32.mrb[0].mxu0
  %230 = vdwg.mxu0
  %232 = vrot.lane.b32.xlu0 %v150, 96
  %v233 = vpop.permute.xlu0 %232
  %v234 = vsel %vm156, %v150, 0
  %v236 = vsel %vm156, %v233, 0
  %238 = vmatprep.subr.mxu0 0.0
  %239 = vmatpush1.xpose.msra.mxu0 %v236
  %240 = vmatprep.subr.mxu0 0.0
  %241 = vmatpush1.xpose.msra.mxu0 0.0
  %242 = vmatprep.subr.mxu0 0.0
  %243 = vmatpush1.xpose.msra.mxu0 0.0
  %244 = vmatprep.subr.mxu0 0.0
  %245 = vmatpush1.xpose.msra.mxu0 0.0
  %246 = vmatprep.subr.mxu0 0.0
  %247 = vmatpush1.xpose.msra.mxu0 0.0
  %248 = vmatprep.subr.mxu0 0.0
  %249 = vmatpush1.xpose.msra.mxu0 0.0
  %250 = vmatprep.subr.mxu0 0.0
  %251 = vmatpush1.xpose.msra.mxu0 0.0
  %252 = vmatprep.subr.mxu0 0.0
  %253 = vmatpush1.xpose.msra.mxu0 0.0
  %254 = vmatprep.subr.mxu0 0.0
  %255 = vmatpush1.xpose.msra.mxu0 0.0
  %256 = vmatprep.subr.mxu0 0.0
  %257 = vmatpush1.xpose.msra.mxu0 0.0
  %258 = vmatprep.subr.mxu0 0.0
  %259 = vmatpush1.xpose.msra.mxu0 0.0
  %260 = vmatprep.subr.mxu0 0.0
  %261 = vmatpush1.xpose.msra.mxu0 0.0
  %262 = vmatprep.subr.mxu0 0.0
  %263 = vmatpush1.xpose.msra.mxu0 0.0
  %264 = vmatprep.subr.mxu0 0.0
  %265 = vmatpush1.xpose.msra.mxu0 0.0
  %266 = vmatprep.subr.mxu0 0.0
  %267 = vmatpush1.xpose.msra.mxu0 0.0
  %268 = vmatprep.subr.mxu0 0.0
  %269 = vmatpush1.xpose.msra.mxu0 0.0
  %270 = vmatprep.subr.mxu0 0.0
  %271 = vmatpush1.xpose.msra.mxu0 0.0
  %272 = vmatprep.subr.mxu0 0.0
  %273 = vmatpush1.xpose.msra.mxu0 0.0
  %274 = vmatprep.subr.mxu0 0.0
  %275 = vmatpush1.xpose.msra.mxu0 0.0
  %276 = vmatprep.subr.mxu0 0.0
  %277 = vmatpush1.xpose.msra.mxu0 0.0
  %278 = vmatprep.subr.mxu0 0.0
  %279 = vmatpush1.xpose.msra.mxu0 0.0
  %280 = vmatprep.subr.mxu0 0.0
  %281 = vmatpush1.xpose.msra.mxu0 0.0
  %282 = vmatprep.subr.mxu0 0.0
  %283 = vmatpush1.xpose.msra.mxu0 0.0
  %284 = vmatprep.subr.mxu0 0.0
  %285 = vmatpush1.xpose.msra.mxu0 0.0
  %286 = vmatprep.subr.mxu0 0.0
  %287 = vmatpush1.xpose.msra.mxu0 0.0
  %288 = vmatprep.subr.mxu0 0.0
  %289 = vmatpush1.xpose.msra.mxu0 0.0
  %290 = vmatprep.subr.mxu0 0.0
  %291 = vmatpush1.xpose.msra.mxu0 0.0
  %292 = vmatprep.subr.mxu0 0.0
  %293 = vmatpush1.xpose.msra.mxu0 0.0
  %294 = vmatprep.subr.mxu0 0.0
  %295 = vmatpush1.xpose.msra.mxu0 0.0
  %296 = vmatprep.subr.mxu0 0.0
  %297 = vmatpush1.xpose.msra.mxu0 0.0
  %298 = vmatprep.subr.mxu0 0.0
  %299 = vmatpush1.xpose.msra.mxu0 0.0
  %300 = vmatprep.subr.mxu0 0.0
  %301 = vmatpush1.xpose.msra.mxu0 0.0
  %302 = vmatprep.mubr.f32.mxu0 0.0
  %303 = vmatmul.mubr.f32.gmra.mrb[0].mxu0 %v234
  %v304 = vpop.f32.mrb[0].mxu0
  %v305 = vadd.f32 0.0, %v304
  %v306 = vpop.f32.mrb[0].mxu0
  %307 = vdwg.mxu0
  %v308 = vsel %vm156, %v228, -inf
  %309 = vmax.xlane.f32.xlu0 %v308
  %v310 = vpop.xlane.xlu0 %309
  %v311 = vsel %vm156, %v305, -inf
  %312 = vmax.xlane.f32.xlu0 %v311
  %v313 = vpop.xlane.xlu0 %312
  %v314 = vsub.f32 %v228, %v310
  %v315 = vsub.f32 %v305, %v313
  %v316 = vmul.f32 %v314, 1.442695
  %v317 = vpow.pop %v316
  %v318 = vmul.f32 %v315, 1.442695
  %v319 = vpow.pop %v318
  %v320 = vsel %vm156, %v317, 0.0
  %321 = vadd.xlane.f32.xlu0 %v320
  %v322 = vpop.xlane.xlu0 %321
  %v323 = vsel %vm156, %v319, 0.0
  %324 = vadd.xlane.f32.xlu0 %v323
  %v325 = vpop.xlane.xlu0 %324
  %v326 = vrcp.pop %v322
  %v327 = vrcp.pop %v325
  %v328 = vmul.f32 %v317, %v326
  %v329 = vmul.f32 %v319, %v327
  %330 = vrot.lane.b32.xlu0 %v145, 64
  %v331 = vpop.permute.xlu0 %330
  %v334 = vsel %vm156, %v328, 0
  %336 = vmatprep.subr.mxu0 0.0
  %337 = vmatpush1.msra.mxu0 %v331
  %338 = vmatprep.subr.mxu0 0.0
  %339 = vmatpush1.msra.mxu0 0.0
  %340 = vmatprep.subr.mxu0 0.0
  %341 = vmatpush1.msra.mxu0 0.0
  %342 = vmatprep.subr.mxu0 0.0
  %343 = vmatpush1.msra.mxu0 0.0
  %344 = vmatprep.subr.mxu0 0.0
  %345 = vmatpush1.msra.mxu0 0.0
  %346 = vmatprep.subr.mxu0 0.0
  %347 = vmatpush1.msra.mxu0 0.0
  %348 = vmatprep.subr.mxu0 0.0
  %349 = vmatpush1.msra.mxu0 0.0
  %350 = vmatprep.subr.mxu0 0.0
  %351 = vmatpush1.msra.mxu0 0.0
  %352 = vmatprep.subr.mxu0 0.0
  %353 = vmatpush1.msra.mxu0 0.0
  %354 = vmatprep.subr.mxu0 0.0
  %355 = vmatpush1.msra.mxu0 0.0
  %356 = vmatprep.subr.mxu0 0.0
  %357 = vmatpush1.msra.mxu0 0.0
  %358 = vmatprep.subr.mxu0 0.0
  %359 = vmatpush1.msra.mxu0 0.0
  %360 = vmatprep.subr.mxu0 0.0
  %361 = vmatpush1.msra.mxu0 0.0
  %362 = vmatprep.subr.mxu0 0.0
  %363 = vmatpush1.msra.mxu0 0.0
  %364 = vmatprep.subr.mxu0 0.0
  %365 = vmatpush1.msra.mxu0 0.0
  %366 = vmatprep.subr.mxu0 0.0
  %367 = vmatpush1.msra.mxu0 0.0
  %368 = vmatprep.subr.mxu0 0.0
  %369 = vmatpush1.msra.mxu0 0.0
  %370 = vmatprep.subr.mxu0 0.0
  %371 = vmatpush1.msra.mxu0 0.0
  %372 = vmatprep.subr.mxu0 0.0
  %373 = vmatpush1.msra.mxu0 0.0
  %374 = vmatprep.subr.mxu0 0.0
  %375 = vmatpush1.msra.mxu0 0.0
  %376 = vmatprep.subr.mxu0 0.0
  %377 = vmatpush1.msra.mxu0 0.0
  %378 = vmatprep.subr.mxu0 0.0
  %379 = vmatpush1.msra.mxu0 0.0
  %380 = vmatprep.subr.mxu0 0.0
  %381 = vmatpush1.msra.mxu0 0.0
  %382 = vmatprep.subr.mxu0 0.0
  %383 = vmatpush1.msra.mxu0 0.0
  %384 = vmatprep.subr.mxu0 0.0
  %385 = vmatpush1.msra.mxu0 0.0
  %386 = vmatprep.subr.mxu0 0.0
  %387 = vmatpush1.msra.mxu0 0.0
  %388 = vmatprep.subr.mxu0 0.0
  %389 = vmatpush1.msra.mxu0 0.0
  %390 = vmatprep.subr.mxu0 0.0
  %391 = vmatpush1.msra.mxu0 0.0
  %392 = vmatprep.subr.mxu0 0.0
  %393 = vmatpush1.msra.mxu0 0.0
  %394 = vmatprep.subr.mxu0 0.0
  %395 = vmatpush1.msra.mxu0 0.0
  %396 = vmatprep.subr.mxu0 0.0
  %397 = vmatpush1.msra.mxu0 0.0
  %398 = vmatprep.subr.mxu0 0.0
  %399 = vmatpush1.msra.mxu0 0.0
  %400 = vmatprep.mubr.f32.mxu0 0.0
  %401 = vmatmul.mubr.f32.gmra.mrb[0].mxu0 %v334
  %v402 = vpop.f32.mrb[0].mxu0
  %v403 = vadd.f32 0.0, %v402
  %v404 = vpop.f32.mrb[0].mxu0
  %405 = vdwg.mxu0
  %406 = vrot.lane.b32.xlu0 %v150, 64
  %v407 = vpop.permute.xlu0 %406
  %v410 = vsel %vm156, %v329, 0
  %412 = vmatprep.subr.mxu0 0.0
  %413 = vmatpush1.msra.mxu0 %v407
  %414 = vmatprep.subr.mxu0 0.0
  %415 = vmatpush1.msra.mxu0 0.0
  %416 = vmatprep.subr.mxu0 0.0
  %417 = vmatpush1.msra.mxu0 0.0
  %418 = vmatprep.subr.mxu0 0.0
  %419 = vmatpush1.msra.mxu0 0.0
  %420 = vmatprep.subr.mxu0 0.0
  %421 = vmatpush1.msra.mxu0 0.0
  %422 = vmatprep.subr.mxu0 0.0
  %423 = vmatpush1.msra.mxu0 0.0
  %424 = vmatprep.subr.mxu0 0.0
  %425 = vmatpush1.msra.mxu0 0.0
  %426 = vmatprep.subr.mxu0 0.0
  %427 = vmatpush1.msra.mxu0 0.0
  %428 = vmatprep.subr.mxu0 0.0
  %429 = vmatpush1.msra.mxu0 0.0
  %430 = vmatprep.subr.mxu0 0.0
  %431 = vmatpush1.msra.mxu0 0.0
  %432 = vmatprep.subr.mxu0 0.0
  %433 = vmatpush1.msra.mxu0 0.0
  %434 = vmatprep.subr.mxu0 0.0
  %435 = vmatpush1.msra.mxu0 0.0
  %436 = vmatprep.subr.mxu0 0.0
  %437 = vmatpush1.msra.mxu0 0.0
  %438 = vmatprep.subr.mxu0 0.0
  %439 = vmatpush1.msra.mxu0 0.0
  %440 = vmatprep.subr.mxu0 0.0
  %441 = vmatpush1.msra.mxu0 0.0
  %442 = vmatprep.subr.mxu0 0.0
  %443 = vmatpush1.msra.mxu0 0.0
  %444 = vmatprep.subr.mxu0 0.0
  %445 = vmatpush1.msra.mxu0 0.0
  %446 = vmatprep.subr.mxu0 0.0
  %447 = vmatpush1.msra.mxu0 0.0
  %448 = vmatprep.subr.mxu0 0.0
  %449 = vmatpush1.msra.mxu0 0.0
  %450 = vmatprep.subr.mxu0 0.0
  %451 = vmatpush1.msra.mxu0 0.0
  %452 = vmatprep.subr.mxu0 0.0
  %453 = vmatpush1.msra.mxu0 0.0
  %454 = vmatprep.subr.mxu0 0.0
  %455 = vmatpush1.msra.mxu0 0.0
  %456 = vmatprep.subr.mxu0 0.0
  %457 = vmatpush1.msra.mxu0 0.0
  %458 = vmatprep.subr.mxu0 0.0
  %459 = vmatpush1.msra.mxu0 0.0
  %460 = vmatprep.subr.mxu0 0.0
  %461 = vmatpush1.msra.mxu0 0.0
  %462 = vmatprep.subr.mxu0 0.0
  %463 = vmatpush1.msra.mxu0 0.0
  %464 = vmatprep.subr.mxu0 0.0
  %465 = vmatpush1.msra.mxu0 0.0
  %466 = vmatprep.subr.mxu0 0.0
  %467 = vmatpush1.msra.mxu0 0.0
  %468 = vmatprep.subr.mxu0 0.0
  %469 = vmatpush1.msra.mxu0 0.0
  %470 = vmatprep.subr.mxu0 0.0
  %471 = vmatpush1.msra.mxu0 0.0
  %472 = vmatprep.subr.mxu0 0.0
  %473 = vmatpush1.msra.mxu0 0.0
  %474 = vmatprep.subr.mxu0 0.0
  %475 = vmatpush1.msra.mxu0 0.0
  %476 = vmatprep.mubr.f32.mxu0 0.0
  %477 = vmatmul.mubr.f32.gmra.mrb[0].mxu0 %v410
  %v478 = vpop.f32.mrb[0].mxu0
  %v479 = vadd.f32 0.0, %v478
  %v480 = vpop.f32.mrb[0].mxu0
  %481 = vdwg.mxu0
  %482 = vrot.lane.b32.xlu0 %v145, 120
  %v483 = vpop.permute.xlu0 %482
  %484 = vrot.lane.b32.xlu0 %v145, 88
  %v485 = vpop.permute.xlu0 %484
  %v486 = vsel %vm156, %v483, 0
  %v488 = vsel %vm156, %v485, 0
  %490 = vmatprep.subr.mxu0 0.0
  %491 = vmatpush1.xpose.msra.mxu0 %v488
  %492 = vmatprep.subr.mxu0 0.0
  %493 = vmatpush1.xpose.msra.mxu0 0.0
  %494 = vmatprep.subr.mxu0 0.0
  %495 = vmatpush1.xpose.msra.mxu0 0.0
  %496 = vmatprep.subr.mxu0 0.0
  %497 = vmatpush1.xpose.msra.mxu0 0.0
  %498 = vmatprep.subr.mxu0 0.0
  %499 = vmatpush1.xpose.msra.mxu0 0.0
  %500 = vmatprep.subr.mxu0 0.0
  %501 = vmatpush1.xpose.msra.mxu0 0.0
  %502 = vmatprep.subr.mxu0 0.0
  %503 = vmatpush1.xpose.msra.mxu0 0.0
  %504 = vmatprep.subr.mxu0 0.0
  %505 = vmatpush1.xpose.msra.mxu0 0.0
  %506 = vmatprep.subr.mxu0 0.0
  %507 = vmatpush1.xpose.msra.mxu0 0.0
  %508 = vmatprep.subr.mxu0 0.0
  %509 = vmatpush1.xpose.msra.mxu0 0.0
  %510 = vmatprep.subr.mxu0 0.0
  %511 = vmatpush1.xpose.msra.mxu0 0.0
  %512 = vmatprep.subr.mxu0 0.0
  %513 = vmatpush1.xpose.msra.mxu0 0.0
  %514 = vmatprep.subr.mxu0 0.0
  %515 = vmatpush1.xpose.msra.mxu0 0.0
  %516 = vmatprep.subr.mxu0 0.0
  %517 = vmatpush1.xpose.msra.mxu0 0.0
  %518 = vmatprep.subr.mxu0 0.0
  %519 = vmatpush1.xpose.msra.mxu0 0.0
  %520 = vmatprep.subr.mxu0 0.0
  %521 = vmatpush1.xpose.msra.mxu0 0.0
  %522 = vmatprep.subr.mxu0 0.0
  %523 = vmatpush1.xpose.msra.mxu0 0.0
  %524 = vmatprep.subr.mxu0 0.0
  %525 = vmatpush1.xpose.msra.mxu0 0.0
  %526 = vmatprep.subr.mxu0 0.0
  %527 = vmatpush1.xpose.msra.mxu0 0.0
  %528 = vmatprep.subr.mxu0 0.0
  %529 = vmatpush1.xpose.msra.mxu0 0.0
  %530 = vmatprep.subr.mxu0 0.0
  %531 = vmatpush1.xpose.msra.mxu0 0.0
  %532 = vmatprep.subr.mxu0 0.0
  %533 = vmatpush1.xpose.msra.mxu0 0.0
  %534 = vmatprep.subr.mxu0 0.0
  %535 = vmatpush1.xpose.msra.mxu0 0.0
  %536 = vmatprep.subr.mxu0 0.0
  %537 = vmatpush1.xpose.msra.mxu0 0.0
  %538 = vmatprep.subr.mxu0 0.0
  %539 = vmatpush1.xpose.msra.mxu0 0.0
  %540 = vmatprep.subr.mxu0 0.0
  %541 = vmatpush1.xpose.msra.mxu0 0.0
  %542 = vmatprep.subr.mxu0 0.0
  %543 = vmatpush1.xpose.msra.mxu0 0.0
  %544 = vmatprep.subr.mxu0 0.0
  %545 = vmatpush1.xpose.msra.mxu0 0.0
  %546 = vmatprep.subr.mxu0 0.0
  %547 = vmatpush1.xpose.msra.mxu0 0.0
  %548 = vmatprep.subr.mxu0 0.0
  %549 = vmatpush1.xpose.msra.mxu0 0.0
  %550 = vmatprep.subr.mxu0 0.0
  %551 = vmatpush1.xpose.msra.mxu0 0.0
  %552 = vmatprep.subr.mxu0 0.0
  %553 = vmatpush1.xpose.msra.mxu0 0.0
  %554 = vmatprep.mubr.f32.mxu0 0.0
  %555 = vmatmul.mubr.f32.gmra.mrb[0].mxu0 %v486
  %v556 = vpop.f32.mrb[0].mxu0
  %v557 = vadd.f32 0.0, %v556
  %v558 = vpop.f32.mrb[0].mxu0
  %559 = vdwg.mxu0
  %560 = vrot.lane.b32.xlu0 %v150, 120
  %v561 = vpop.permute.xlu0 %560
  %562 = vrot.lane.b32.xlu0 %v150, 88
  %v563 = vpop.permute.xlu0 %562
  %v564 = vsel %vm156, %v561, 0
  %v566 = vsel %vm156, %v563, 0
  %568 = vmatprep.subr.mxu0 0.0
  %569 = vmatpush1.xpose.msra.mxu0 %v566
  %570 = vmatprep.subr.mxu0 0.0
  %571 = vmatpush1.xpose.msra.mxu0 0.0
  %572 = vmatprep.subr.mxu0 0.0
  %573 = vmatpush1.xpose.msra.mxu0 0.0
  %574 = vmatprep.subr.mxu0 0.0
  %575 = vmatpush1.xpose.msra.mxu0 0.0
  %576 = vmatprep.subr.mxu0 0.0
  %577 = vmatpush1.xpose.msra.mxu0 0.0
  %578 = vmatprep.subr.mxu0 0.0
  %579 = vmatpush1.xpose.msra.mxu0 0.0
  %580 = vmatprep.subr.mxu0 0.0
  %581 = vmatpush1.xpose.msra.mxu0 0.0
  %582 = vmatprep.subr.mxu0 0.0
  %583 = vmatpush1.xpose.msra.mxu0 0.0
  %584 = vmatprep.subr.mxu0 0.0
  %585 = vmatpush1.xpose.msra.mxu0 0.0
  %586 = vmatprep.subr.mxu0 0.0
  %587 = vmatpush1.xpose.msra.mxu0 0.0
  %588 = vmatprep.subr.mxu0 0.0
  %589 = vmatpush1.xpose.msra.mxu0 0.0
  %590 = vmatprep.subr.mxu0 0.0
  %591 = vmatpush1.xpose.msra.mxu0 0.0
  %592 = vmatprep.subr.mxu0 0.0
  %593 = vmatpush1.xpose.msra.mxu0 0.0
  %594 = vmatprep.subr.mxu0 0.0
  %595 = vmatpush1.xpose.msra.mxu0 0.0
  %596 = vmatprep.subr.mxu0 0.0
  %597 = vmatpush1.xpose.msra.mxu0 0.0
  %598 = vmatprep.subr.mxu0 0.0
  %599 = vmatpush1.xpose.msra.mxu0 0.0
  %600 = vmatprep.subr.mxu0 0.0
  %601 = vmatpush1.xpose.msra.mxu0 0.0
  %602 = vmatprep.subr.mxu0 0.0
  %603 = vmatpush1.xpose.msra.mxu0 0.0
  %604 = vmatprep.subr.mxu0 0.0
  %605 = vmatpush1.xpose.msra.mxu0 0.0
  %606 = vmatprep.subr.mxu0 0.0
  %607 = vmatpush1.xpose.msra.mxu0 0.0
  %608 = vmatprep.subr.mxu0 0.0
  %609 = vmatpush1.xpose.msra.mxu0 0.0
  %610 = vmatprep.subr.mxu0 0.0
  %611 = vmatpush1.xpose.msra.mxu0 0.0
  %612 = vmatprep.subr.mxu0 0.0
  %613 = vmatpush1.xpose.msra.mxu0 0.0
  %614 = vmatprep.subr.mxu0 0.0
  %615 = vmatpush1.xpose.msra.mxu0 0.0
  %616 = vmatprep.subr.mxu0 0.0
  %617 = vmatpush1.xpose.msra.mxu0 0.0
  %618 = vmatprep.subr.mxu0 0.0
  %619 = vmatpush1.xpose.msra.mxu0 0.0
  %620 = vmatprep.subr.mxu0 0.0
  %621 = vmatpush1.xpose.msra.mxu0 0.0
  %622 = vmatprep.subr.mxu0 0.0
  %623 = vmatpush1.xpose.msra.mxu0 0.0
  %624 = vmatprep.subr.mxu0 0.0
  %625 = vmatpush1.xpose.msra.mxu0 0.0
  %626 = vmatprep.subr.mxu0 0.0
  %627 = vmatpush1.xpose.msra.mxu0 0.0
  %628 = vmatprep.subr.mxu0 0.0
  %629 = vmatpush1.xpose.msra.mxu0 0.0
  %630 = vmatprep.subr.mxu0 0.0
  %631 = vmatpush1.xpose.msra.mxu0 0.0
  %632 = vmatprep.mubr.f32.mxu0 0.0
  %633 = vmatmul.mubr.f32.gmra.mrb[0].mxu0 %v564
  %v634 = vpop.f32.mrb[0].mxu0
  %v635 = vadd.f32 0.0, %v634
  %v636 = vpop.f32.mrb[0].mxu0
  %637 = vdwg.mxu0
  %v638 = vsel %vm156, %v557, -inf
  %639 = vmax.xlane.f32.xlu0 %v638
  %v640 = vpop.xlane.xlu0 %639
  %v641 = vsel %vm156, %v635, -inf
  %642 = vmax.xlane.f32.xlu0 %v641
  %v643 = vpop.xlane.xlu0 %642
  %v644 = vsub.f32 %v557, %v640
  %v645 = vsub.f32 %v635, %v643
  %v646 = vmul.f32 %v644, 1.442695
  %v647 = vpow.pop %v646
  %v648 = vmul.f32 %v645, 1.442695
  %v649 = vpow.pop %v648
  %v650 = vsel %vm156, %v647, 0.0
  %651 = vadd.xlane.f32.xlu0 %v650
  %v652 = vpop.xlane.xlu0 %651
  %v653 = vsel %vm156, %v649, 0.0
  %654 = vadd.xlane.f32.xlu0 %v653
  %v655 = vpop.xlane.xlu0 %654
  %v656 = vrcp.pop %v652
  %v657 = vrcp.pop %v655
  %v658 = vmul.f32 %v647, %v656
  %v659 = vmul.f32 %v649, %v657
  %660 = vrot.lane.b32.xlu0 %v145, 56
  %v661 = vpop.permute.xlu0 %660
  %v664 = vsel %vm156, %v658, 0
  %666 = vmatprep.subr.mxu0 0.0
  %667 = vmatpush1.msra.mxu0 %v661
  %668 = vmatprep.subr.mxu0 0.0
  %669 = vmatpush1.msra.mxu0 0.0
  %670 = vmatprep.subr.mxu0 0.0
  %671 = vmatpush1.msra.mxu0 0.0
  %672 = vmatprep.subr.mxu0 0.0
  %673 = vmatpush1.msra.mxu0 0.0
  %674 = vmatprep.subr.mxu0 0.0
  %675 = vmatpush1.msra.mxu0 0.0
  %676 = vmatprep.subr.mxu0 0.0
  %677 = vmatpush1.msra.mxu0 0.0
  %678 = vmatprep.subr.mxu0 0.0
  %679 = vmatpush1.msra.mxu0 0.0
  %680 = vmatprep.subr.mxu0 0.0
  %681 = vmatpush1.msra.mxu0 0.0
  %682 = vmatprep.subr.mxu0 0.0
  %683 = vmatpush1.msra.mxu0 0.0
  %684 = vmatprep.subr.mxu0 0.0
  %685 = vmatpush1.msra.mxu0 0.0
  %686 = vmatprep.subr.mxu0 0.0
  %687 = vmatpush1.msra.mxu0 0.0
  %688 = vmatprep.subr.mxu0 0.0
  %689 = vmatpush1.msra.mxu0 0.0
  %690 = vmatprep.subr.mxu0 0.0
  %691 = vmatpush1.msra.mxu0 0.0
  %692 = vmatprep.subr.mxu0 0.0
  %693 = vmatpush1.msra.mxu0 0.0
  %694 = vmatprep.subr.mxu0 0.0
  %695 = vmatpush1.msra.mxu0 0.0
  %696 = vmatprep.subr.mxu0 0.0
  %697 = vmatpush1.msra.mxu0 0.0
  %698 = vmatprep.subr.mxu0 0.0
  %699 = vmatpush1.msra.mxu0 0.0
  %700 = vmatprep.subr.mxu0 0.0
  %701 = vmatpush1.msra.mxu0 0.0
  %702 = vmatprep.subr.mxu0 0.0
  %703 = vmatpush1.msra.mxu0 0.0
  %704 = vmatprep.subr.mxu0 0.0
  %705 = vmatpush1.msra.mxu0 0.0
  %706 = vmatprep.subr.mxu0 0.0
  %707 = vmatpush1.msra.mxu0 0.0
  %708 = vmatprep.subr.mxu0 0.0
  %709 = vmatpush1.msra.mxu0 0.0
  %710 = vmatprep.subr.mxu0 0.0
  %711 = vmatpush1.msra.mxu0 0.0
  %712 = vmatprep.subr.mxu0 0.0
  %713 = vmatpush1.msra.mxu0 0.0
  %714 = vmatprep.subr.mxu0 0.0
  %715 = vmatpush1.msra.mxu0 0.0
  %716 = vmatprep.subr.mxu0 0.0
  %717 = vmatpush1.msra.mxu0 0.0
  %718 = vmatprep.subr.mxu0 0.0
  %719 = vmatpush1.msra.mxu0 0.0
  %720 = vmatprep.subr.mxu0 0.0
  %721 = vmatpush1.msra.mxu0 0.0
  %722 = vmatprep.subr.mxu0 0.0
  %723 = vmatpush1.msra.mxu0 0.0
  %724 = vmatprep.subr.mxu0 0.0
  %725 = vmatpush1.msra.mxu0 0.0
  %726 = vmatprep.subr.mxu0 0.0
  %727 = vmatpush1.msra.mxu0 0.0
  %728 = vmatprep.subr.mxu0 0.0
  %729 = vmatpush1.msra.mxu0 0.0
  %730 = vmatprep.mubr.f32.mxu0 0.0
  %731 = vmatmul.mubr.f32.gmra.mrb[0].mxu0 %v664
  %v732 = vpop.f32.mrb[0].mxu0
  %v733 = vadd.f32 0.0, %v732
  %v734 = vpop.f32.mrb[0].mxu0
  %735 = vdwg.mxu0
  %736 = vrot.lane.b32.xlu0 %v150, 56
  %v737 = vpop.permute.xlu0 %736
  %v740 = vsel %vm156, %v659, 0
  %742 = vmatprep.subr.mxu0 0.0
  %743 = vmatpush1.msra.mxu0 %v737
  %744 = vmatprep.subr.mxu0 0.0
  %745 = vmatpush1.msra.mxu0 0.0
  %746 = vmatprep.subr.mxu0 0.0
  %747 = vmatpush1.msra.mxu0 0.0
  %748 = vmatprep.subr.mxu0 0.0
  %749 = vmatpush1.msra.mxu0 0.0
  %750 = vmatprep.subr.mxu0 0.0
  %751 = vmatpush1.msra.mxu0 0.0
  %752 = vmatprep.subr.mxu0 0.0
  %753 = vmatpush1.msra.mxu0 0.0
  %754 = vmatprep.subr.mxu0 0.0
  %755 = vmatpush1.msra.mxu0 0.0
  %756 = vmatprep.subr.mxu0 0.0
  %757 = vmatpush1.msra.mxu0 0.0
  %758 = vmatprep.subr.mxu0 0.0
  %759 = vmatpush1.msra.mxu0 0.0
  %760 = vmatprep.subr.mxu0 0.0
  %761 = vmatpush1.msra.mxu0 0.0
  %762 = vmatprep.subr.mxu0 0.0
  %763 = vmatpush1.msra.mxu0 0.0
  %764 = vmatprep.subr.mxu0 0.0
  %765 = vmatpush1.msra.mxu0 0.0
  %766 = vmatprep.subr.mxu0 0.0
  %767 = vmatpush1.msra.mxu0 0.0
  %768 = vmatprep.subr.mxu0 0.0
  %769 = vmatpush1.msra.mxu0 0.0
  %770 = vmatprep.subr.mxu0 0.0
  %771 = vmatpush1.msra.mxu0 0.0
  %772 = vmatprep.subr.mxu0 0.0
  %773 = vmatpush1.msra.mxu0 0.0
  %774 = vmatprep.subr.mxu0 0.0
  %775 = vmatpush1.msra.mxu0 0.0
  %776 = vmatprep.subr.mxu0 0.0
  %777 = vmatpush1.msra.mxu0 0.0
  %778 = vmatprep.subr.mxu0 0.0
  %779 = vmatpush1.msra.mxu0 0.0
  %780 = vmatprep.subr.mxu0 0.0
  %781 = vmatpush1.msra.mxu0 0.0
  %782 = vmatprep.subr.mxu0 0.0
  %783 = vmatpush1.msra.mxu0 0.0
  %784 = vmatprep.subr.mxu0 0.0
  %785 = vmatpush1.msra.mxu0 0.0
  %786 = vmatprep.subr.mxu0 0.0
  %787 = vmatpush1.msra.mxu0 0.0
  %788 = vmatprep.subr.mxu0 0.0
  %789 = vmatpush1.msra.mxu0 0.0
  %790 = vmatprep.subr.mxu0 0.0
  %791 = vmatpush1.msra.mxu0 0.0
  %792 = vmatprep.subr.mxu0 0.0
  %793 = vmatpush1.msra.mxu0 0.0
  %794 = vmatprep.subr.mxu0 0.0
  %795 = vmatpush1.msra.mxu0 0.0
  %796 = vmatprep.subr.mxu0 0.0
  %797 = vmatpush1.msra.mxu0 0.0
  %798 = vmatprep.subr.mxu0 0.0
  %799 = vmatpush1.msra.mxu0 0.0
  %800 = vmatprep.subr.mxu0 0.0
  %801 = vmatpush1.msra.mxu0 0.0
  %802 = vmatprep.subr.mxu0 0.0
  %803 = vmatpush1.msra.mxu0 0.0
  %804 = vmatprep.subr.mxu0 0.0
  %805 = vmatpush1.msra.mxu0 0.0
  %806 = vmatprep.mubr.f32.mxu0 0.0
  %807 = vmatmul.mubr.f32.gmra.mrb[0].mxu0 %v740
  %v808 = vpop.f32.mrb[0].mxu0
  %v809 = vadd.f32 0.0, %v808
  %v810 = vpop.f32.mrb[0].mxu0
  %811 = vdwg.mxu0
  %812 = vrot.lane.b32.xlu0 %v145, 112
  %v813 = vpop.permute.xlu0 %812
  %814 = vrot.lane.b32.xlu0 %v145, 80
  %v815 = vpop.permute.xlu0 %814
  %v816 = vsel %vm156, %v813, 0
  %v818 = vsel %vm156, %v815, 0
  %820 = vmatprep.subr.mxu0 0.0
  %821 = vmatpush1.xpose.msra.mxu0 %v818
  %822 = vmatprep.subr.mxu0 0.0
  %823 = vmatpush1.xpose.msra.mxu0 0.0
  %824 = vmatprep.subr.mxu0 0.0
  %825 = vmatpush1.xpose.msra.mxu0 0.0
  %826 = vmatprep.subr.mxu0 0.0
  %827 = vmatpush1.xpose.msra.mxu0 0.0
  %828 = vmatprep.subr.mxu0 0.0
  %829 = vmatpush1.xpose.msra.mxu0 0.0
  %830 = vmatprep.subr.mxu0 0.0
  %831 = vmatpush1.xpose.msra.mxu0 0.0
  %832 = vmatprep.subr.mxu0 0.0
  %833 = vmatpush1.xpose.msra.mxu0 0.0
  %834 = vmatprep.subr.mxu0 0.0
  %835 = vmatpush1.xpose.msra.mxu0 0.0
  %836 = vmatprep.subr.mxu0 0.0
  %837 = vmatpush1.xpose.msra.mxu0 0.0
  %838 = vmatprep.subr.mxu0 0.0
  %839 = vmatpush1.xpose.msra.mxu0 0.0
  %840 = vmatprep.subr.mxu0 0.0
  %841 = vmatpush1.xpose.msra.mxu0 0.0
  %842 = vmatprep.subr.mxu0 0.0
  %843 = vmatpush1.xpose.msra.mxu0 0.0
  %844 = vmatprep.subr.mxu0 0.0
  %845 = vmatpush1.xpose.msra.mxu0 0.0
  %846 = vmatprep.subr.mxu0 0.0
  %847 = vmatpush1.xpose.msra.mxu0 0.0
  %848 = vmatprep.subr.mxu0 0.0
  %849 = vmatpush1.xpose.msra.mxu0 0.0
  %850 = vmatprep.subr.mxu0 0.0
  %851 = vmatpush1.xpose.msra.mxu0 0.0
  %852 = vmatprep.subr.mxu0 0.0
  %853 = vmatpush1.xpose.msra.mxu0 0.0
  %854 = vmatprep.subr.mxu0 0.0
  %855 = vmatpush1.xpose.msra.mxu0 0.0
  %856 = vmatprep.subr.mxu0 0.0
  %857 = vmatpush1.xpose.msra.mxu0 0.0
  %858 = vmatprep.subr.mxu0 0.0
  %859 = vmatpush1.xpose.msra.mxu0 0.0
  %860 = vmatprep.subr.mxu0 0.0
  %861 = vmatpush1.xpose.msra.mxu0 0.0
  %862 = vmatprep.subr.mxu0 0.0
  %863 = vmatpush1.xpose.msra.mxu0 0.0
  %864 = vmatprep.subr.mxu0 0.0
  %865 = vmatpush1.xpose.msra.mxu0 0.0
  %866 = vmatprep.subr.mxu0 0.0
  %867 = vmatpush1.xpose.msra.mxu0 0.0
  %868 = vmatprep.subr.mxu0 0.0
  %869 = vmatpush1.xpose.msra.mxu0 0.0
  %870 = vmatprep.subr.mxu0 0.0
  %871 = vmatpush1.xpose.msra.mxu0 0.0
  %872 = vmatprep.subr.mxu0 0.0
  %873 = vmatpush1.xpose.msra.mxu0 0.0
  %874 = vmatprep.subr.mxu0 0.0
  %875 = vmatpush1.xpose.msra.mxu0 0.0
  %876 = vmatprep.subr.mxu0 0.0
  %877 = vmatpush1.xpose.msra.mxu0 0.0
  %878 = vmatprep.subr.mxu0 0.0
  %879 = vmatpush1.xpose.msra.mxu0 0.0
  %880 = vmatprep.subr.mxu0 0.0
  %881 = vmatpush1.xpose.msra.mxu0 0.0
  %882 = vmatprep.subr.mxu0 0.0
  %883 = vmatpush1.xpose.msra.mxu0 0.0
  %884 = vmatprep.mubr.f32.mxu0 0.0
  %885 = vmatmul.mubr.f32.gmra.mrb[0].mxu0 %v816
  %v886 = vpop.f32.mrb[0].mxu0
  %v887 = vadd.f32 0.0, %v886
  %v888 = vpop.f32.mrb[0].mxu0
  %889 = vdwg.mxu0
  %890 = vrot.lane.b32.xlu0 %v150, 112
  %v891 = vpop.permute.xlu0 %890
  %892 = vrot.lane.b32.xlu0 %v150, 80
  %v893 = vpop.permute.xlu0 %892
  %v894 = vsel %vm156, %v891, 0
  %v896 = vsel %vm156, %v893, 0
  %898 = vmatprep.subr.mxu0 0.0
  %899 = vmatpush1.xpose.msra.mxu0 %v896
  %900 = vmatprep.subr.mxu0 0.0
  %901 = vmatpush1.xpose.msra.mxu0 0.0
  %902 = vmatprep.subr.mxu0 0.0
  %903 = vmatpush1.xpose.msra.mxu0 0.0
  %904 = vmatprep.subr.mxu0 0.0
  %905 = vmatpush1.xpose.msra.mxu0 0.0
  %906 = vmatprep.subr.mxu0 0.0
  %907 = vmatpush1.xpose.msra.mxu0 0.0
  %908 = vmatprep.subr.mxu0 0.0
  %909 = vmatpush1.xpose.msra.mxu0 0.0
  %910 = vmatprep.subr.mxu0 0.0
  %911 = vmatpush1.xpose.msra.mxu0 0.0
  %912 = vmatprep.subr.mxu0 0.0
  %913 = vmatpush1.xpose.msra.mxu0 0.0
  %914 = vmatprep.subr.mxu0 0.0
  %915 = vmatpush1.xpose.msra.mxu0 0.0
  %916 = vmatprep.subr.mxu0 0.0
  %917 = vmatpush1.xpose.msra.mxu0 0.0
  %918 = vmatprep.subr.mxu0 0.0
  %919 = vmatpush1.xpose.msra.mxu0 0.0
  %920 = vmatprep.subr.mxu0 0.0
  %921 = vmatpush1.xpose.msra.mxu0 0.0
  %922 = vmatprep.subr.mxu0 0.0
  %923 = vmatpush1.xpose.msra.mxu0 0.0
  %924 = vmatprep.subr.mxu0 0.0
  %925 = vmatpush1.xpose.msra.mxu0 0.0
  %926 = vmatprep.subr.mxu0 0.0
  %927 = vmatpush1.xpose.msra.mxu0 0.0
  %928 = vmatprep.subr.mxu0 0.0
  %929 = vmatpush1.xpose.msra.mxu0 0.0
  %930 = vmatprep.subr.mxu0 0.0
  %931 = vmatpush1.xpose.msra.mxu0 0.0
  %932 = vmatprep.subr.mxu0 0.0
  %933 = vmatpush1.xpose.msra.mxu0 0.0
  %934 = vmatprep.subr.mxu0 0.0
  %935 = vmatpush1.xpose.msra.mxu0 0.0
  %936 = vmatprep.subr.mxu0 0.0
  %937 = vmatpush1.xpose.msra.mxu0 0.0
  %938 = vmatprep.subr.mxu0 0.0
  %939 = vmatpush1.xpose.msra.mxu0 0.0
  %940 = vmatprep.subr.mxu0 0.0
  %941 = vmatpush1.xpose.msra.mxu0 0.0
  %942 = vmatprep.subr.mxu0 0.0
  %943 = vmatpush1.xpose.msra.mxu0 0.0
  %944 = vmatprep.subr.mxu0 0.0
  %945 = vmatpush1.xpose.msra.mxu0 0.0
  %946 = vmatprep.subr.mxu0 0.0
  %947 = vmatpush1.xpose.msra.mxu0 0.0
  %948 = vmatprep.subr.mxu0 0.0
  %949 = vmatpush1.xpose.msra.mxu0 0.0
  %950 = vmatprep.subr.mxu0 0.0
  %951 = vmatpush1.xpose.msra.mxu0 0.0
  %952 = vmatprep.subr.mxu0 0.0
  %953 = vmatpush1.xpose.msra.mxu0 0.0
  %954 = vmatprep.subr.mxu0 0.0
  %955 = vmatpush1.xpose.msra.mxu0 0.0
  %956 = vmatprep.subr.mxu0 0.0
  %957 = vmatpush1.xpose.msra.mxu0 0.0
  %958 = vmatprep.subr.mxu0 0.0
  %959 = vmatpush1.xpose.msra.mxu0 0.0
  %960 = vmatprep.subr.mxu0 0.0
  %961 = vmatpush1.xpose.msra.mxu0 0.0
  %962 = vmatprep.mubr.f32.mxu0 0.0
  %963 = vmatmul.mubr.f32.gmra.mrb[0].mxu0 %v894
  %v964 = vpop.f32.mrb[0].mxu0
  %v965 = vadd.f32 0.0, %v964
  %v966 = vpop.f32.mrb[0].mxu0
  %967 = vdwg.mxu0
  %v968 = vsel %vm156, %v887, -inf
  %969 = vmax.xlane.f32.xlu0 %v968
  %v970 = vpop.xlane.xlu0 %969
  %v971 = vsel %vm156, %v965, -inf
  %972 = vmax.xlane.f32.xlu0 %v971
  %v973 = vpop.xlane.xlu0 %972
  %v974 = vsub.f32 %v887, %v970
  %v975 = vsub.f32 %v965, %v973
  %v976 = vmul.f32 %v974, 1.442695
  %v977 = vpow.pop %v976
  %v978 = vmul.f32 %v975, 1.442695
  %v979 = vpow.pop %v978
  %v980 = vsel %vm156, %v977, 0.0
  %981 = vadd.xlane.f32.xlu0 %v980
  %v982 = vpop.xlane.xlu0 %981
  %v983 = vsel %vm156, %v979, 0.0
  %984 = vadd.xlane.f32.xlu0 %v983
  %v985 = vpop.xlane.xlu0 %984
  %v986 = vrcp.pop %v982
  %v987 = vrcp.pop %v985
  %v988 = vmul.f32 %v977, %v986
  %v989 = vmul.f32 %v979, %v987
  %990 = vrot.lane.b32.xlu0 %v145, 48
  %v991 = vpop.permute.xlu0 %990
  %v994 = vsel %vm156, %v988, 0
  %996 = vmatprep.subr.mxu0 0.0
  %997 = vmatpush1.msra.mxu0 %v991
  %998 = vmatprep.subr.mxu0 0.0
  %999 = vmatpush1.msra.mxu0 0.0
  %1000 = vmatprep.subr.mxu0 0.0
  %1001 = vmatpush1.msra.mxu0 0.0
  %1002 = vmatprep.subr.mxu0 0.0
  %1003 = vmatpush1.msra.mxu0 0.0
  %1004 = vmatprep.subr.mxu0 0.0
  %1005 = vmatpush1.msra.mxu0 0.0
  %1006 = vmatprep.subr.mxu0 0.0
  %1007 = vmatpush1.msra.mxu0 0.0
  %1008 = vmatprep.subr.mxu0 0.0
  %1009 = vmatpush1.msra.mxu0 0.0
  %1010 = vmatprep.subr.mxu0 0.0
  %1011 = vmatpush1.msra.mxu0 0.0
  %1012 = vmatprep.subr.mxu0 0.0
  %1013 = vmatpush1.msra.mxu0 0.0
  %1014 = vmatprep.subr.mxu0 0.0
  %1015 = vmatpush1.msra.mxu0 0.0
  %1016 = vmatprep.subr.mxu0 0.0
  %1017 = vmatpush1.msra.mxu0 0.0
  %1018 = vmatprep.subr.mxu0 0.0
  %1019 = vmatpush1.msra.mxu0 0.0
  %1020 = vmatprep.subr.mxu0 0.0
  %1021 = vmatpush1.msra.mxu0 0.0
  %1022 = vmatprep.subr.mxu0 0.0
  %1023 = vmatpush1.msra.mxu0 0.0
  %1024 = vmatprep.subr.mxu0 0.0
  %1025 = vmatpush1.msra.mxu0 0.0
  %1026 = vmatprep.subr.mxu0 0.0
  %1027 = vmatpush1.msra.mxu0 0.0
  %1028 = vmatprep.subr.mxu0 0.0
  %1029 = vmatpush1.msra.mxu0 0.0
  %1030 = vmatprep.subr.mxu0 0.0
  %1031 = vmatpush1.msra.mxu0 0.0
  %1032 = vmatprep.subr.mxu0 0.0
  %1033 = vmatpush1.msra.mxu0 0.0
  %1034 = vmatprep.subr.mxu0 0.0
  %1035 = vmatpush1.msra.mxu0 0.0
  %1036 = vmatprep.subr.mxu0 0.0
  %1037 = vmatpush1.msra.mxu0 0.0
  %1038 = vmatprep.subr.mxu0 0.0
  %1039 = vmatpush1.msra.mxu0 0.0
  %1040 = vmatprep.subr.mxu0 0.0
  %1041 = vmatpush1.msra.mxu0 0.0
  %1042 = vmatprep.subr.mxu0 0.0
  %1043 = vmatpush1.msra.mxu0 0.0
  %1044 = vmatprep.subr.mxu0 0.0
  %1045 = vmatpush1.msra.mxu0 0.0
  %1046 = vmatprep.subr.mxu0 0.0
  %1047 = vmatpush1.msra.mxu0 0.0
  %1048 = vmatprep.subr.mxu0 0.0
  %1049 = vmatpush1.msra.mxu0 0.0
  %1050 = vmatprep.subr.mxu0 0.0
  %1051 = vmatpush1.msra.mxu0 0.0
  %1052 = vmatprep.subr.mxu0 0.0
  %1053 = vmatpush1.msra.mxu0 0.0
  %1054 = vmatprep.subr.mxu0 0.0
  %1055 = vmatpush1.msra.mxu0 0.0
  %1056 = vmatprep.subr.mxu0 0.0
  %1057 = vmatpush1.msra.mxu0 0.0
  %1058 = vmatprep.subr.mxu0 0.0
  %1059 = vmatpush1.msra.mxu0 0.0
  %1060 = vmatprep.mubr.f32.mxu0 0.0
  %1061 = vmatmul.mubr.f32.gmra.mrb[0].mxu0 %v994
  %v1062 = vpop.f32.mrb[0].mxu0
  %v1063 = vadd.f32 0.0, %v1062
  %v1064 = vpop.f32.mrb[0].mxu0
  %1065 = vdwg.mxu0
  %1066 = vrot.lane.b32.xlu0 %v150, 48
  %v1067 = vpop.permute.xlu0 %1066
  %v1070 = vsel %vm156, %v989, 0
  %1072 = vmatprep.subr.mxu0 0.0
  %1073 = vmatpush1.msra.mxu0 %v1067
  %1074 = vmatprep.subr.mxu0 0.0
  %1075 = vmatpush1.msra.mxu0 0.0
  %1076 = vmatprep.subr.mxu0 0.0
  %1077 = vmatpush1.msra.mxu0 0.0
  %1078 = vmatprep.subr.mxu0 0.0
  %1079 = vmatpush1.msra.mxu0 0.0
  %1080 = vmatprep.subr.mxu0 0.0
  %1081 = vmatpush1.msra.mxu0 0.0
  %1082 = vmatprep.subr.mxu0 0.0
  %1083 = vmatpush1.msra.mxu0 0.0
  %1084 = vmatprep.subr.mxu0 0.0
  %1085 = vmatpush1.msra.mxu0 0.0
  %1086 = vmatprep.subr.mxu0 0.0
  %1087 = vmatpush1.msra.mxu0 0.0
  %1088 = vmatprep.subr.mxu0 0.0
  %1089 = vmatpush1.msra.mxu0 0.0
  %1090 = vmatprep.subr.mxu0 0.0
  %1091 = vmatpush1.msra.mxu0 0.0
  %1092 = vmatprep.subr.mxu0 0.0
  %1093 = vmatpush1.msra.mxu0 0.0
  %1094 = vmatprep.subr.mxu0 0.0
  %1095 = vmatpush1.msra.mxu0 0.0
  %1096 = vmatprep.subr.mxu0 0.0
  %1097 = vmatpush1.msra.mxu0 0.0
  %1098 = vmatprep.subr.mxu0 0.0
  %1099 = vmatpush1.msra.mxu0 0.0
  %1100 = vmatprep.subr.mxu0 0.0
  %1101 = vmatpush1.msra.mxu0 0.0
  %1102 = vmatprep.subr.mxu0 0.0
  %1103 = vmatpush1.msra.mxu0 0.0
  %1104 = vmatprep.subr.mxu0 0.0
  %1105 = vmatpush1.msra.mxu0 0.0
  %1106 = vmatprep.subr.mxu0 0.0
  %1107 = vmatpush1.msra.mxu0 0.0
  %1108 = vmatprep.subr.mxu0 0.0
  %1109 = vmatpush1.msra.mxu0 0.0
  %1110 = vmatprep.subr.mxu0 0.0
  %1111 = vmatpush1.msra.mxu0 0.0
  %1112 = vmatprep.subr.mxu0 0.0
  %1113 = vmatpush1.msra.mxu0 0.0
  %1114 = vmatprep.subr.mxu0 0.0
  %1115 = vmatpush1.msra.mxu0 0.0
  %1116 = vmatprep.subr.mxu0 0.0
  %1117 = vmatpush1.msra.mxu0 0.0
  %1118 = vmatprep.subr.mxu0 0.0
  %1119 = vmatpush1.msra.mxu0 0.0
  %1120 = vmatprep.subr.mxu0 0.0
  %1121 = vmatpush1.msra.mxu0 0.0
  %1122 = vmatprep.subr.mxu0 0.0
  %1123 = vmatpush1.msra.mxu0 0.0
  %1124 = vmatprep.subr.mxu0 0.0
  %1125 = vmatpush1.msra.mxu0 0.0
  %1126 = vmatprep.subr.mxu0 0.0
  %1127 = vmatpush1.msra.mxu0 0.0
  %1128 = vmatprep.subr.mxu0 0.0
  %1129 = vmatpush1.msra.mxu0 0.0
  %1130 = vmatprep.subr.mxu0 0.0
  %1131 = vmatpush1.msra.mxu0 0.0
  %1132 = vmatprep.subr.mxu0 0.0
  %1133 = vmatpush1.msra.mxu0 0.0
  %1134 = vmatprep.subr.mxu0 0.0
  %1135 = vmatpush1.msra.mxu0 0.0
  %1136 = vmatprep.mubr.f32.mxu0 0.0
  %1137 = vmatmul.mubr.f32.gmra.mrb[0].mxu0 %v1070
  %v1138 = vpop.f32.mrb[0].mxu0
  %v1139 = vadd.f32 0.0, %v1138
  %v1140 = vpop.f32.mrb[0].mxu0
  %1141 = vdwg.mxu0
  %1142 = vrot.lane.b32.xlu0 %v145, 104
  %v1143 = vpop.permute.xlu0 %1142
  %1144 = vrot.lane.b32.xlu0 %v145, 72
  %v1145 = vpop.permute.xlu0 %1144
  %v1146 = vsel %vm156, %v1143, 0
  %v1148 = vsel %vm156, %v1145, 0
  %1150 = vmatprep.subr.mxu0 0.0
  %1151 = vmatpush1.xpose.msra.mxu0 %v1148
  %1152 = vmatprep.subr.mxu0 0.0
  %1153 = vmatpush1.xpose.msra.mxu0 0.0
  %1154 = vmatprep.subr.mxu0 0.0
  %1155 = vmatpush1.xpose.msra.mxu0 0.0
  %1156 = vmatprep.subr.mxu0 0.0
  %1157 = vmatpush1.xpose.msra.mxu0 0.0
  %1158 = vmatprep.subr.mxu0 0.0
  %1159 = vmatpush1.xpose.msra.mxu0 0.0
  %1160 = vmatprep.subr.mxu0 0.0
  %1161 = vmatpush1.xpose.msra.mxu0 0.0
  %1162 = vmatprep.subr.mxu0 0.0
  %1163 = vmatpush1.xpose.msra.mxu0 0.0
  %1164 = vmatprep.subr.mxu0 0.0
  %1165 = vmatpush1.xpose.msra.mxu0 0.0
  %1166 = vmatprep.subr.mxu0 0.0
  %1167 = vmatpush1.xpose.msra.mxu0 0.0
  %1168 = vmatprep.subr.mxu0 0.0
  %1169 = vmatpush1.xpose.msra.mxu0 0.0
  %1170 = vmatprep.subr.mxu0 0.0
  %1171 = vmatpush1.xpose.msra.mxu0 0.0
  %1172 = vmatprep.subr.mxu0 0.0
  %1173 = vmatpush1.xpose.msra.mxu0 0.0
  %1174 = vmatprep.subr.mxu0 0.0
  %1175 = vmatpush1.xpose.msra.mxu0 0.0
  %1176 = vmatprep.subr.mxu0 0.0
  %1177 = vmatpush1.xpose.msra.mxu0 0.0
  %1178 = vmatprep.subr.mxu0 0.0
  %1179 = vmatpush1.xpose.msra.mxu0 0.0
  %1180 = vmatprep.subr.mxu0 0.0
  %1181 = vmatpush1.xpose.msra.mxu0 0.0
  %1182 = vmatprep.subr.mxu0 0.0
  %1183 = vmatpush1.xpose.msra.mxu0 0.0
  %1184 = vmatprep.subr.mxu0 0.0
  %1185 = vmatpush1.xpose.msra.mxu0 0.0
  %1186 = vmatprep.subr.mxu0 0.0
  %1187 = vmatpush1.xpose.msra.mxu0 0.0
  %1188 = vmatprep.subr.mxu0 0.0
  %1189 = vmatpush1.xpose.msra.mxu0 0.0
  %1190 = vmatprep.subr.mxu0 0.0
  %1191 = vmatpush1.xpose.msra.mxu0 0.0
  %1192 = vmatprep.subr.mxu0 0.0
  %1193 = vmatpush1.xpose.msra.mxu0 0.0
  %1194 = vmatprep.subr.mxu0 0.0
  %1195 = vmatpush1.xpose.msra.mxu0 0.0
  %1196 = vmatprep.subr.mxu0 0.0
  %1197 = vmatpush1.xpose.msra.mxu0 0.0
  %1198 = vmatprep.subr.mxu0 0.0
  %1199 = vmatpush1.xpose.msra.mxu0 0.0
  %1200 = vmatprep.subr.mxu0 0.0
  %1201 = vmatpush1.xpose.msra.mxu0 0.0
  %1202 = vmatprep.subr.mxu0 0.0
  %1203 = vmatpush1.xpose.msra.mxu0 0.0
  %1204 = vmatprep.subr.mxu0 0.0
  %1205 = vmatpush1.xpose.msra.mxu0 0.0
  %1206 = vmatprep.subr.mxu0 0.0
  %1207 = vmatpush1.xpose.msra.mxu0 0.0
  %1208 = vmatprep.subr.mxu0 0.0
  %1209 = vmatpush1.xpose.msra.mxu0 0.0
  %1210 = vmatprep.subr.mxu0 0.0
  %1211 = vmatpush1.xpose.msra.mxu0 0.0
  %1212 = vmatprep.subr.mxu0 0.0
  %1213 = vmatpush1.xpose.msra.mxu0 0.0
  %1214 = vmatprep.mubr.f32.mxu0 0.0
  %1215 = vmatmul.mubr.f32.gmra.mrb[0].mxu0 %v1146
  %v1216 = vpop.f32.mrb[0].mxu0
  %v1217 = vadd.f32 0.0, %v1216
  %v1218 = vpop.f32.mrb[0].mxu0
  %1219 = vdwg.mxu0
  %1220 = vrot.lane.b32.xlu0 %v150, 104
  %v1221 = vpop.permute.xlu0 %1220
  %1222 = vrot.lane.b32.xlu0 %v150, 72
  %v1223 = vpop.permute.xlu0 %1222
  %v1224 = vsel %vm156, %v1221, 0
  %v1226 = vsel %vm156, %v1223, 0
  %1228 = vmatprep.subr.mxu0 0.0
  %1229 = vmatpush1.xpose.msra.mxu0 %v1226
  %1230 = vmatprep.subr.mxu0 0.0
  %1231 = vmatpush1.xpose.msra.mxu0 0.0
  %1232 = vmatprep.subr.mxu0 0.0
  %1233 = vmatpush1.xpose.msra.mxu0 0.0
  %1234 = vmatprep.subr.mxu0 0.0
  %1235 = vmatpush1.xpose.msra.mxu0 0.0
  %1236 = vmatprep.subr.mxu0 0.0
  %1237 = vmatpush1.xpose.msra.mxu0 0.0
  %1238 = vmatprep.subr.mxu0 0.0
  %1239 = vmatpush1.xpose.msra.mxu0 0.0
  %1240 = vmatprep.subr.mxu0 0.0
  %1241 = vmatpush1.xpose.msra.mxu0 0.0
  %1242 = vmatprep.subr.mxu0 0.0
  %1243 = vmatpush1.xpose.msra.mxu0 0.0
  %1244 = vmatprep.subr.mxu0 0.0
  %1245 = vmatpush1.xpose.msra.mxu0 0.0
  %1246 = vmatprep.subr.mxu0 0.0
  %1247 = vmatpush1.xpose.msra.mxu0 0.0
  %1248 = vmatprep.subr.mxu0 0.0
  %1249 = vmatpush1.xpose.msra.mxu0 0.0
  %1250 = vmatprep.subr.mxu0 0.0
  %1251 = vmatpush1.xpose.msra.mxu0 0.0
  %1252 = vmatprep.subr.mxu0 0.0
  %1253 = vmatpush1.xpose.msra.mxu0 0.0
  %1254 = vmatprep.subr.mxu0 0.0
  %1255 = vmatpush1.xpose.msra.mxu0 0.0
  %1256 = vmatprep.subr.mxu0 0.0
  %1257 = vmatpush1.xpose.msra.mxu0 0.0
  %1258 = vmatprep.subr.mxu0 0.0
  %1259 = vmatpush1.xpose.msra.mxu0 0.0
  %1260 = vmatprep.subr.mxu0 0.0
  %1261 = vmatpush1.xpose.msra.mxu0 0.0
  %1262 = vmatprep.subr.mxu0 0.0
  %1263 = vmatpush1.xpose.msra.mxu0 0.0
  %1264 = vmatprep.subr.mxu0 0.0
  %1265 = vmatpush1.xpose.msra.mxu0 0.0
  %1266 = vmatprep.subr.mxu0 0.0
  %1267 = vmatpush1.xpose.msra.mxu0 0.0
  %1268 = vmatprep.subr.mxu0 0.0
  %1269 = vmatpush1.xpose.msra.mxu0 0.0
  %1270 = vmatprep.subr.mxu0 0.0
  %1271 = vmatpush1.xpose.msra.mxu0 0.0
  %1272 = vmatprep.subr.mxu0 0.0
  %1273 = vmatpush1.xpose.msra.mxu0 0.0
  %1274 = vmatprep.subr.mxu0 0.0
  %1275 = vmatpush1.xpose.msra.mxu0 0.0
  %1276 = vmatprep.subr.mxu0 0.0
  %1277 = vmatpush1.xpose.msra.mxu0 0.0
  %1278 = vmatprep.subr.mxu0 0.0
  %1279 = vmatpush1.xpose.msra.mxu0 0.0
  %1280 = vmatprep.subr.mxu0 0.0
  %1281 = vmatpush1.xpose.msra.mxu0 0.0
  %1282 = vmatprep.subr.mxu0 0.0
  %1283 = vmatpush1.xpose.msra.mxu0 0.0
  %1284 = vmatprep.subr.mxu0 0.0
  %1285 = vmatpush1.xpose.msra.mxu0 0.0
  %1286 = vmatprep.subr.mxu0 0.0
  %1287 = vmatpush1.xpose.msra.mxu0 0.0
  %1288 = vmatprep.subr.mxu0 0.0
  %1289 = vmatpush1.xpose.msra.mxu0 0.0
  %1290 = vmatprep.subr.mxu0 0.0
  %1291 = vmatpush1.xpose.msra.mxu0 0.0
  %1292 = vmatprep.mubr.f32.mxu0 0.0
  %1293 = vmatmul.mubr.f32.gmra.mrb[0].mxu0 %v1224
  %v1294 = vpop.f32.mrb[0].mxu0
  %v1295 = vadd.f32 0.0, %v1294
  %v1296 = vpop.f32.mrb[0].mxu0
  %1297 = vdwg.mxu0
  %v1298 = vsel %vm156, %v1217, -inf
  %1299 = vmax.xlane.f32.xlu0 %v1298
  %v1300 = vpop.xlane.xlu0 %1299
  %v1301 = vsel %vm156, %v1295, -inf
  %1302 = vmax.xlane.f32.xlu0 %v1301
  %v1303 = vpop.xlane.xlu0 %1302
  %v1304 = vsub.f32 %v1217, %v1300
  %v1305 = vsub.f32 %v1295, %v1303
  %v1306 = vmul.f32 %v1304, 1.442695
  %v1307 = vpow.pop %v1306
  %v1308 = vmul.f32 %v1305, 1.442695
  %v1309 = vpow.pop %v1308
  %v1310 = vsel %vm156, %v1307, 0.0
  %1311 = vadd.xlane.f32.xlu0 %v1310
  %v1312 = vpop.xlane.xlu0 %1311
  %v1313 = vsel %vm156, %v1309, 0.0
  %1314 = vadd.xlane.f32.xlu0 %v1313
  %v1315 = vpop.xlane.xlu0 %1314
  %v1316 = vrcp.pop %v1312
  %v1317 = vrcp.pop %v1315
  %v1318 = vmul.f32 %v1307, %v1316
  %v1319 = vmul.f32 %v1309, %v1317
  %1320 = vrot.lane.b32.xlu0 %v145, 40
  %v1321 = vpop.permute.xlu0 %1320
  %v1324 = vsel %vm156, %v1318, 0
  %1326 = vmatprep.subr.mxu0 0.0
  %1327 = vmatpush1.msra.mxu0 %v1321
  %1328 = vmatprep.subr.mxu0 0.0
  %1329 = vmatpush1.msra.mxu0 0.0
  %1330 = vmatprep.subr.mxu0 0.0
  %1331 = vmatpush1.msra.mxu0 0.0
  %1332 = vmatprep.subr.mxu0 0.0
  %1333 = vmatpush1.msra.mxu0 0.0
  %1334 = vmatprep.subr.mxu0 0.0
  %1335 = vmatpush1.msra.mxu0 0.0
  %1336 = vmatprep.subr.mxu0 0.0
  %1337 = vmatpush1.msra.mxu0 0.0
  %1338 = vmatprep.subr.mxu0 0.0
  %1339 = vmatpush1.msra.mxu0 0.0
  %1340 = vmatprep.subr.mxu0 0.0
  %1341 = vmatpush1.msra.mxu0 0.0
  %1342 = vmatprep.subr.mxu0 0.0
  %1343 = vmatpush1.msra.mxu0 0.0
  %1344 = vmatprep.subr.mxu0 0.0
  %1345 = vmatpush1.msra.mxu0 0.0
  %1346 = vmatprep.subr.mxu0 0.0
  %1347 = vmatpush1.msra.mxu0 0.0
  %1348 = vmatprep.subr.mxu0 0.0
  %1349 = vmatpush1.msra.mxu0 0.0
  %1350 = vmatprep.subr.mxu0 0.0
  %1351 = vmatpush1.msra.mxu0 0.0
  %1352 = vmatprep.subr.mxu0 0.0
  %1353 = vmatpush1.msra.mxu0 0.0
  %1354 = vmatprep.subr.mxu0 0.0
  %1355 = vmatpush1.msra.mxu0 0.0
  %1356 = vmatprep.subr.mxu0 0.0
  %1357 = vmatpush1.msra.mxu0 0.0
  %1358 = vmatprep.subr.mxu0 0.0
  %1359 = vmatpush1.msra.mxu0 0.0
  %1360 = vmatprep.subr.mxu0 0.0
  %1361 = vmatpush1.msra.mxu0 0.0
  %1362 = vmatprep.subr.mxu0 0.0
  %1363 = vmatpush1.msra.mxu0 0.0
  %1364 = vmatprep.subr.mxu0 0.0
  %1365 = vmatpush1.msra.mxu0 0.0
  %1366 = vmatprep.subr.mxu0 0.0
  %1367 = vmatpush1.msra.mxu0 0.0
  %1368 = vmatprep.subr.mxu0 0.0
  %1369 = vmatpush1.msra.mxu0 0.0
  %1370 = vmatprep.subr.mxu0 0.0
  %1371 = vmatpush1.msra.mxu0 0.0
  %1372 = vmatprep.subr.mxu0 0.0
  %1373 = vmatpush1.msra.mxu0 0.0
  %1374 = vmatprep.subr.mxu0 0.0
  %1375 = vmatpush1.msra.mxu0 0.0
  %1376 = vmatprep.subr.mxu0 0.0
  %1377 = vmatpush1.msra.mxu0 0.0
  %1378 = vmatprep.subr.mxu0 0.0
  %1379 = vmatpush1.msra.mxu0 0.0
  %1380 = vmatprep.subr.mxu0 0.0
  %1381 = vmatpush1.msra.mxu0 0.0
  %1382 = vmatprep.subr.mxu0 0.0
  %1383 = vmatpush1.msra.mxu0 0.0
  %1384 = vmatprep.subr.mxu0 0.0
  %1385 = vmatpush1.msra.mxu0 0.0
  %1386 = vmatprep.subr.mxu0 0.0
  %1387 = vmatpush1.msra.mxu0 0.0
  %1388 = vmatprep.subr.mxu0 0.0
  %1389 = vmatpush1.msra.mxu0 0.0
  %1390 = vmatprep.mubr.f32.mxu0 0.0
  %1391 = vmatmul.mubr.f32.gmra.mrb[0].mxu0 %v1324
  %v1392 = vpop.f32.mrb[0].mxu0
  %v1393 = vadd.f32 0.0, %v1392
  %v1394 = vpop.f32.mrb[0].mxu0
  %1395 = vdwg.mxu0
  %1396 = vrot.lane.b32.xlu0 %v150, 40
  %v1397 = vpop.permute.xlu0 %1396
  %v1400 = vsel %vm156, %v1319, 0
  %1402 = vmatprep.subr.mxu0 0.0
  %1403 = vmatpush1.msra.mxu0 %v1397
  %1404 = vmatprep.subr.mxu0 0.0
  %1405 = vmatpush1.msra.mxu0 0.0
  %1406 = vmatprep.subr.mxu0 0.0
  %1407 = vmatpush1.msra.mxu0 0.0
  %1408 = vmatprep.subr.mxu0 0.0
  %1409 = vmatpush1.msra.mxu0 0.0
  %1410 = vmatprep.subr.mxu0 0.0
  %1411 = vmatpush1.msra.mxu0 0.0
  %1412 = vmatprep.subr.mxu0 0.0
  %1413 = vmatpush1.msra.mxu0 0.0
  %1414 = vmatprep.subr.mxu0 0.0
  %1415 = vmatpush1.msra.mxu0 0.0
  %1416 = vmatprep.subr.mxu0 0.0
  %1417 = vmatpush1.msra.mxu0 0.0
  %1418 = vmatprep.subr.mxu0 0.0
  %1419 = vmatpush1.msra.mxu0 0.0
  %1420 = vmatprep.subr.mxu0 0.0
  %1421 = vmatpush1.msra.mxu0 0.0
  %1422 = vmatprep.subr.mxu0 0.0
  %1423 = vmatpush1.msra.mxu0 0.0
  %1424 = vmatprep.subr.mxu0 0.0
  %1425 = vmatpush1.msra.mxu0 0.0
  %1426 = vmatprep.subr.mxu0 0.0
  %1427 = vmatpush1.msra.mxu0 0.0
  %1428 = vmatprep.subr.mxu0 0.0
  %1429 = vmatpush1.msra.mxu0 0.0
  %1430 = vmatprep.subr.mxu0 0.0
  %1431 = vmatpush1.msra.mxu0 0.0
  %1432 = vmatprep.subr.mxu0 0.0
  %1433 = vmatpush1.msra.mxu0 0.0
  %1434 = vmatprep.subr.mxu0 0.0
  %1435 = vmatpush1.msra.mxu0 0.0
  %1436 = vmatprep.subr.mxu0 0.0
  %1437 = vmatpush1.msra.mxu0 0.0
  %1438 = vmatprep.subr.mxu0 0.0
  %1439 = vmatpush1.msra.mxu0 0.0
  %1440 = vmatprep.subr.mxu0 0.0
  %1441 = vmatpush1.msra.mxu0 0.0
  %1442 = vmatprep.subr.mxu0 0.0
  %1443 = vmatpush1.msra.mxu0 0.0
  %1444 = vmatprep.subr.mxu0 0.0
  %1445 = vmatpush1.msra.mxu0 0.0
  %1446 = vmatprep.subr.mxu0 0.0
  %1447 = vmatpush1.msra.mxu0 0.0
  %1448 = vmatprep.subr.mxu0 0.0
  %1449 = vmatpush1.msra.mxu0 0.0
  %1450 = vmatprep.subr.mxu0 0.0
  %1451 = vmatpush1.msra.mxu0 0.0
  %1452 = vmatprep.subr.mxu0 0.0
  %1453 = vmatpush1.msra.mxu0 0.0
  %1454 = vmatprep.subr.mxu0 0.0
  %1455 = vmatpush1.msra.mxu0 0.0
  %1456 = vmatprep.subr.mxu0 0.0
  %1457 = vmatpush1.msra.mxu0 0.0
  %1458 = vmatprep.subr.mxu0 0.0
  %1459 = vmatpush1.msra.mxu0 0.0
  %1460 = vmatprep.subr.mxu0 0.0
  %1461 = vmatpush1.msra.mxu0 0.0
  %1462 = vmatprep.subr.mxu0 0.0
  %1463 = vmatpush1.msra.mxu0 0.0
  %1464 = vmatprep.subr.mxu0 0.0
  %1465 = vmatpush1.msra.mxu0 0.0
  %1466 = vmatprep.mubr.f32.mxu0 0.0
  %1467 = vmatmul.mubr.f32.gmra.mrb[0].mxu0 %v1400
  %v1468 = vpop.f32.mrb[0].mxu0
  %v1469 = vadd.f32 0.0, %v1468
  %v1470 = vpop.f32.mrb[0].mxu0
  %1471 = vdwg.mxu0
  %1474 = vrot.lane.b32.xlu0 %v733, 8
  %v1475 = vpop.permute.xlu0 %1474
  %1476 = vrot.lane.b32.xlu0 %v809, 8
  %v1477 = vpop.permute.xlu0 %1476
  %1482 = vrot.lane.b32.xlu0 %v1063, 16
  %v1483 = vpop.permute.xlu0 %1482
  %1484 = vrot.lane.b32.xlu0 %v1139, 16
  %v1485 = vpop.permute.xlu0 %1484
  %1490 = vrot.lane.b32.xlu0 %v1393, 24
  %v1491 = vpop.permute.xlu0 %1490
  %1492 = vrot.lane.b32.xlu0 %v1469, 24
  %v1493 = vpop.permute.xlu0 %1492
  %v1496 = vsel %vm156, %v403, %v1475
  %v1497 = vsel %vm156, %v479, %v1477
  %vm1498 = vcmask 130048
  %v1499 = vsel %vm1498, %v1496, %v1483
  %v1500 = vsel %vm1498, %v1497, %v1485
  %vm1501 = vcmask 195584
  %v1502 = vsel %vm1501, %v1499, %v1491
  %v1503 = vsel %vm1501, %v1500, %v1493
  %v1504 = vlaneseq
  %v1505 = vshrl.u32 %v1504, 7
  %v1506 = vsub.s32 3, %v1505
  %v1507 = vrot.slane %v27, %v1506
  %1512 = vrot.lane.b32.xlu0 %v19, 32
  %v1513 = vpop.permute.xlu0 %1512
  %1514 = vrot.lane.b32.xlu0 %v21, 32
  %v1515 = vpop.permute.xlu0 %1514
  %1516 = vrot.lane.b32.xlu0 %v23, 32
  %v1517 = vpop.permute.xlu0 %1516
  %1518 = vrot.lane.b32.xlu0 %v25, 32
  %v1519 = vpop.permute.xlu0 %1518
  %v1525 = vsel %vm28, %v1502, 0
  %v1528 = vsel %vm28, %v1503, 0
  %1530 = vmatprep.subr.mxu0 0.0
  %1531 = vmatpush1.msra.mxu0 %v1513
  %1532 = vmatprep.subr.mxu0 0.0
  %1533 = vmatpush1.msra.mxu0 %v1515
  %1534 = vmatprep.subr.mxu0 0.0
  %1535 = vmatpush1.msra.mxu0 %v1517
  %1536 = vmatprep.subr.mxu0 0.0
  %1537 = vmatpush1.msra.mxu0 %v1519
  %1538 = vmatprep.subr.mxu0 0.0
  %1539 = vmatpush1.msra.mxu0 0.0
  %1540 = vmatprep.subr.mxu0 0.0
  %1541 = vmatpush1.msra.mxu0 0.0
  %1542 = vmatprep.subr.mxu0 0.0
  %1543 = vmatpush1.msra.mxu0 0.0
  %1544 = vmatprep.subr.mxu0 0.0
  %1545 = vmatpush1.msra.mxu0 0.0
  %1546 = vmatprep.subr.mxu0 0.0
  %1547 = vmatpush1.msra.mxu0 0.0
  %1548 = vmatprep.subr.mxu0 0.0
  %1549 = vmatpush1.msra.mxu0 0.0
  %1550 = vmatprep.subr.mxu0 0.0
  %1551 = vmatpush1.msra.mxu0 0.0
  %1552 = vmatprep.subr.mxu0 0.0
  %1553 = vmatpush1.msra.mxu0 0.0
  %1554 = vmatprep.subr.mxu0 0.0
  %1555 = vmatpush1.msra.mxu0 0.0
  %1556 = vmatprep.subr.mxu0 0.0
  %1557 = vmatpush1.msra.mxu0 0.0
  %1558 = vmatprep.subr.mxu0 0.0
  %1559 = vmatpush1.msra.mxu0 0.0
  %1560 = vmatprep.subr.mxu0 0.0
  %1561 = vmatpush1.msra.mxu0 0.0
  %1562 = vmatprep.subr.mxu0 0.0
  %1563 = vmatpush1.msra.mxu0 0.0
  %1564 = vmatprep.subr.mxu0 0.0
  %1565 = vmatpush1.msra.mxu0 0.0
  %1566 = vmatprep.subr.mxu0 0.0
  %1567 = vmatpush1.msra.mxu0 0.0
  %1568 = vmatprep.subr.mxu0 0.0
  %1569 = vmatpush1.msra.mxu0 0.0
  %1570 = vmatprep.subr.mxu0 0.0
  %1571 = vmatpush1.msra.mxu0 0.0
  %1572 = vmatprep.subr.mxu0 0.0
  %1573 = vmatpush1.msra.mxu0 0.0
  %1574 = vmatprep.subr.mxu0 0.0
  %1575 = vmatpush1.msra.mxu0 0.0
  %1576 = vmatprep.subr.mxu0 0.0
  %1577 = vmatpush1.msra.mxu0 0.0
  %1578 = vmatprep.subr.mxu0 0.0
  %1579 = vmatpush1.msra.mxu0 0.0
  %1580 = vmatprep.subr.mxu0 0.0
  %1581 = vmatpush1.msra.mxu0 0.0
  %1582 = vmatprep.subr.mxu0 0.0
  %1583 = vmatpush1.msra.mxu0 0.0
  %1584 = vmatprep.subr.mxu0 0.0
  %1585 = vmatpush1.msra.mxu0 0.0
  %1586 = vmatprep.subr.mxu0 0.0
  %1587 = vmatpush1.msra.mxu0 0.0
  %1588 = vmatprep.subr.mxu0 0.0
  %1589 = vmatpush1.msra.mxu0 0.0
  %1590 = vmatprep.subr.mxu0 0.0
  %1591 = vmatpush1.msra.mxu0 0.0
  %1592 = vmatprep.subr.mxu0 0.0
  %1593 = vmatpush1.msra.mxu0 0.0
  %1594 = vmatprep.mubr.f32.mxu0 0.0
  %1595 = vmatmul.mubr.f32.gmra.mrb[0].mxu0 %v1525
  %v1596 = vpop.f32.mrb[0].mxu0
  %v1597 = vadd.f32 %v1507, %v1596
  %v1598 = vpop.f32.mrb[0].mxu0
  %1599 = vmatprep.mubr.f32.mxu0 0.0
  %1600 = vmatmul.mubr.f32.gmra.mrb[0].mxu0 %v1528
  %v1601 = vpop.f32.mrb[0].mxu0
  %v1602 = vadd.f32 %v1507, %v1601
  %v1603 = vpop.f32.mrb[0].mxu0
  %1604 = vdwg.mxu0
  %v1605 = vadd.f32 %v17, %v1597
  %v1606 = vadd.f32 %v18, %v1602
  %v1607 = vsel %vm28, %v1605, 0.0
  %1608 = vadd.xlane.f32.xlu0 %v1607
  %v1609 = vpop.xlane.xlu0 %1608
  %v1610 = vsel %vm28, %v1606, 0.0
  %1611 = vadd.xlane.f32.xlu0 %v1610
  %v1612 = vpop.xlane.xlu0 %1611
  %v1613 = vmul.f32 %v1609, %v35
  %v1614 = vmul.f32 %v1612, %v35
  %v1615 = vsub.f32 %v1605, %v1613
  %v1616 = vsub.f32 %v1606, %v1614
  %v1617 = vmul.f32 %v1615, %v1615
  %v1618 = vmul.f32 %v1616, %v1616
  %v1619 = vsel %vm28, %v1617, 0.0
  %1620 = vadd.xlane.f32.xlu0 %v1619
  %v1621 = vpop.xlane.xlu0 %1620
  %v1622 = vsel %vm28, %v1618, 0.0
  %1623 = vadd.xlane.f32.xlu0 %v1622
  %v1624 = vpop.xlane.xlu0 %1623
  %v1625 = vmul.f32 %v1621, %v35
  %v1626 = vmul.f32 %v1624, %v35
  %v1627 = vadd.f32 %v1625, 1e-05
  %v1628 = vadd.f32 %v1626, 1e-05
  %v1629 = vrsqrt.pop %v1627
  %v1630 = vrsqrt.pop %v1628
  %v1631 = vmul.f32 %v1615, %v1629
  %v1632 = vmul.f32 %v1616, %v1630
  %v1633 = vlaneseq
  %v1634 = vshrl.u32 %v1633, 7
  %v1635 = vsub.s32 4, %v1634
  %v1636 = vrot.slane %v27, %v1635
  %v1637 = vmul.f32 %v1631, %v1636
  %v1638 = vmul.f32 %v1632, %v1636
  %v1639 = vlaneseq
  %v1640 = vshrl.u32 %v1639, 7
  %v1641 = vsub.s32 5, %v1640
  %v1642 = vrot.slane %v27, %v1641
  %v1643 = vadd.f32 %v1637, %v1642
  %v1644 = vadd.f32 %v1638, %v1642
  %v1645 = vlaneseq
  %v1646 = vshrl.u32 %v1645, 7
  %v1647 = vsub.s32 6, %v1646
  %v1648 = vrot.slane %v27, %v1647
  %v1650 = vsel %vm28, %v1643, 0
  %v1653 = vsel %vm28, %v1644, 0
  %1655 = vmatprep.subr.mxu0 0.0
  %1656 = vmatpush1.msra.mxu0 %v20
  %1657 = vmatprep.subr.mxu0 0.0
  %1658 = vmatpush1.msra.mxu0 %v22
  %1659 = vmatprep.subr.mxu0 0.0
  %1660 = vmatpush1.msra.mxu0 %v24
  %1661 = vmatprep.subr.mxu0 0.0
  %1662 = vmatpush1.msra.mxu0 %v26
  %1663 = vmatprep.subr.mxu0 0.0
  %1664 = vmatpush1.msra.mxu0 0.0
  %1665 = vmatprep.subr.mxu0 0.0
  %1666 = vmatpush1.msra.mxu0 0.0
  %1667 = vmatprep.subr.mxu0 0.0
  %1668 = vmatpush1.msra.mxu0 0.0
  %1669 = vmatprep.subr.mxu0 0.0
  %1670 = vmatpush1.msra.mxu0 0.0
  %1671 = vmatprep.subr.mxu0 0.0
  %1672 = vmatpush1.msra.mxu0 0.0
  %1673 = vmatprep.subr.mxu0 0.0
  %1674 = vmatpush1.msra.mxu0 0.0
  %1675 = vmatprep.subr.mxu0 0.0
  %1676 = vmatpush1.msra.mxu0 0.0
  %1677 = vmatprep.subr.mxu0 0.0
  %1678 = vmatpush1.msra.mxu0 0.0
  %1679 = vmatprep.subr.mxu0 0.0
  %1680 = vmatpush1.msra.mxu0 0.0
  %1681 = vmatprep.subr.mxu0 0.0
  %1682 = vmatpush1.msra.mxu0 0.0
  %1683 = vmatprep.subr.mxu0 0.0
  %1684 = vmatpush1.msra.mxu0 0.0
  %1685 = vmatprep.subr.mxu0 0.0
  %1686 = vmatpush1.msra.mxu0 0.0
  %1687 = vmatprep.subr.mxu0 0.0
  %1688 = vmatpush1.msra.mxu0 0.0
  %1689 = vmatprep.subr.mxu0 0.0
  %1690 = vmatpush1.msra.mxu0 0.0
  %1691 = vmatprep.subr.mxu0 0.0
  %1692 = vmatpush1.msra.mxu0 0.0
  %1693 = vmatprep.subr.mxu0 0.0
  %1694 = vmatpush1.msra.mxu0 0.0
  %1695 = vmatprep.subr.mxu0 0.0
  %1696 = vmatpush1.msra.mxu0 0.0
  %1697 = vmatprep.subr.mxu0 0.0
  %1698 = vmatpush1.msra.mxu0 0.0
  %1699 = vmatprep.subr.mxu0 0.0
  %1700 = vmatpush1.msra.mxu0 0.0
  %1701 = vmatprep.subr.mxu0 0.0
  %1702 = vmatpush1.msra.mxu0 0.0
  %1703 = vmatprep.subr.mxu0 0.0
  %1704 = vmatpush1.msra.mxu0 0.0
  %1705 = vmatprep.subr.mxu0 0.0
  %1706 = vmatpush1.msra.mxu0 0.0
  %1707 = vmatprep.subr.mxu0 0.0
  %1708 = vmatpush1.msra.mxu0 0.0
  %1709 = vmatprep.subr.mxu0 0.0
  %1710 = vmatpush1.msra.mxu0 0.0
  %1711 = vmatprep.subr.mxu0 0.0
  %1712 = vmatpush1.msra.mxu0 0.0
  %1713 = vmatprep.subr.mxu0 0.0
  %1714 = vmatpush1.msra.mxu0 0.0
  %1715 = vmatprep.subr.mxu0 0.0
  %1716 = vmatpush1.msra.mxu0 0.0
  %1717 = vmatprep.subr.mxu0 0.0
  %1718 = vmatpush1.msra.mxu0 0.0
  %1719 = vmatprep.mubr.f32.mxu0 0.0
  %1720 = vmatmul.mubr.f32.gmra.mrb[0].mxu0 %v1650
  %v1721 = vpop.f32.mrb[0].mxu0
  %v1722 = vadd.f32 %v1648, %v1721
  %v1723 = vpop.f32.mrb[0].mxu0
  %1724 = vmatprep.mubr.f32.mxu0 0.0
  %1725 = vmatmul.mubr.f32.gmra.mrb[0].mxu0 %v1653
  %v1726 = vpop.f32.mrb[0].mxu0
  %v1727 = vadd.f32 %v1648, %v1726
  %v1728 = vpop.f32.mrb[0].mxu0
  %1729 = vdwg.mxu0
  %v1730 = vmul.f32 %v1722, 0.5
  %v1731 = vmul.f32 %v1727, 0.5
  %v1732 = vmul.f32 %v1722, 0.70710677
  %v1733 = vmul.f32 %v1727, 0.70710677
  %v1734 = verf.f32.pop %v1732
  %v1735 = verf.f32.pop %v1733
  %v1736 = vadd.f32 %v1734, 1.0
  %v1737 = vadd.f32 %v1735, 1.0
  %v1738 = vmul.f32 %v1730, %v1736
  %v1739 = vmul.f32 %v1731, %v1737
  %v1740 = vld [vmem:[%s2] sm:$0xff]
  %v1741 = vld [vmem:[%s2 + $0x8] sm:$0xff]
  %v1742 = vld [vmem:[%s2 + $0x10] sm:$0xff]
  %v1743 = vld [vmem:[%s2 + $0x18] sm:$0xff]
  %v1744 = vld [vmem:[%s2 + $0x20] sm:$0xff]
  %v1745 = vld [vmem:[%s2 + $0x28] sm:$0xff]
  %v1746 = vld [vmem:[%s2 + $0x30] sm:$0xff]
  %v1747 = vld [vmem:[%s2 + $0x38] sm:$0xff]
  %v1748 = vlaneseq
  %v1749 = vshrl.u32 %v1748, 7
  %v1750 = vsub.s32 7, %v1749
  %v1751 = vrot.slane %v27, %v1750
  %vm1752 = vcmask 523264
  %v1754 = vsel %vm1752, %v1738, 0
  %v1757 = vsel %vm1752, %v1739, 0
  %1759 = vmatprep.subr.mxu0 0.0
  %1760 = vmatpush1.msra.mxu0 %v1740
  %1761 = vmatprep.subr.mxu0 0.0
  %1762 = vmatpush1.msra.mxu0 %v1741
  %1763 = vmatprep.subr.mxu0 0.0
  %1764 = vmatpush1.msra.mxu0 %v1742
  %1765 = vmatprep.subr.mxu0 0.0
  %1766 = vmatpush1.msra.mxu0 %v1743
  %1767 = vmatprep.subr.mxu0 0.0
  %1768 = vmatpush1.msra.mxu0 %v1744
  %1769 = vmatprep.subr.mxu0 0.0
  %1770 = vmatpush1.msra.mxu0 %v1745
  %1771 = vmatprep.subr.mxu0 0.0
  %1772 = vmatpush1.msra.mxu0 %v1746
  %1773 = vmatprep.subr.mxu0 0.0
  %1774 = vmatpush1.msra.mxu0 %v1747
  %1775 = vmatprep.subr.mxu0 0.0
  %1776 = vmatpush1.msra.mxu0 0.0
  %1777 = vmatprep.subr.mxu0 0.0
  %1778 = vmatpush1.msra.mxu0 0.0
  %1779 = vmatprep.subr.mxu0 0.0
  %1780 = vmatpush1.msra.mxu0 0.0
  %1781 = vmatprep.subr.mxu0 0.0
  %1782 = vmatpush1.msra.mxu0 0.0
  %1783 = vmatprep.subr.mxu0 0.0
  %1784 = vmatpush1.msra.mxu0 0.0
  %1785 = vmatprep.subr.mxu0 0.0
  %1786 = vmatpush1.msra.mxu0 0.0
  %1787 = vmatprep.subr.mxu0 0.0
  %1788 = vmatpush1.msra.mxu0 0.0
  %1789 = vmatprep.subr.mxu0 0.0
  %1790 = vmatpush1.msra.mxu0 0.0
  %1791 = vmatprep.subr.mxu0 0.0
  %1792 = vmatpush1.msra.mxu0 0.0
  %1793 = vmatprep.subr.mxu0 0.0
  %1794 = vmatpush1.msra.mxu0 0.0
  %1795 = vmatprep.subr.mxu0 0.0
  %1796 = vmatpush1.msra.mxu0 0.0
  %1797 = vmatprep.subr.mxu0 0.0
  %1798 = vmatpush1.msra.mxu0 0.0
  %1799 = vmatprep.subr.mxu0 0.0
  %1800 = vmatpush1.msra.mxu0 0.0
  %1801 = vmatprep.subr.mxu0 0.0
  %1802 = vmatpush1.msra.mxu0 0.0
  %1803 = vmatprep.subr.mxu0 0.0
  %1804 = vmatpush1.msra.mxu0 0.0
  %1805 = vmatprep.subr.mxu0 0.0
  %1806 = vmatpush1.msra.mxu0 0.0
  %1807 = vmatprep.subr.mxu0 0.0
  %1808 = vmatpush1.msra.mxu0 0.0
  %1809 = vmatprep.subr.mxu0 0.0
  %1810 = vmatpush1.msra.mxu0 0.0
  %1811 = vmatprep.subr.mxu0 0.0
  %1812 = vmatpush1.msra.mxu0 0.0
  %1813 = vmatprep.subr.mxu0 0.0
  %1814 = vmatpush1.msra.mxu0 0.0
  %1815 = vmatprep.subr.mxu0 0.0
  %1816 = vmatpush1.msra.mxu0 0.0
  %1817 = vmatprep.subr.mxu0 0.0
  %1818 = vmatpush1.msra.mxu0 0.0
  %1819 = vmatprep.subr.mxu0 0.0
  %1820 = vmatpush1.msra.mxu0 0.0
  %1821 = vmatprep.subr.mxu0 0.0
  %1822 = vmatpush1.msra.mxu0 0.0
  %1823 = vmatprep.mubr.f32.mxu0 0.0
  %1824 = vmatmul.mubr.f32.gmra.mrb[0].mxu0 %v1754
  %v1825 = vpop.f32.mrb[0].mxu0
  %v1826 = vadd.f32 %v1751, %v1825
  %v1827 = vpop.f32.mrb[0].mxu0
  %1828 = vmatprep.mubr.f32.mxu0 0.0
  %1829 = vmatmul.mubr.f32.gmra.mrb[0].mxu0 %v1757
  %v1830 = vpop.f32.mrb[0].mxu0
  %v1831 = vadd.f32 %v1751, %v1830
  %v1832 = vpop.f32.mrb[0].mxu0
  %1833 = vdwg.mxu0
  %v1834 = vadd.f32 %v1605, %v1826
  %v1835 = vadd.f32 %v1606, %v1831
  %1836 = vst.msk [vmem:[%s4] sm:$0xff] %vm28, %v1834
  %1837 = vst.msk [vmem:[%s4 + $0x8] sm:$0xff] %vm28, %v1835
  // Predicated region
  $region18: #{attention_block.1} parent=0 // pred_check
    _
  $region19: #{attention_block.1} parent=0 // pred_check_branch
    %1839 = sbr.rel (0) target = $region21
  $region20: #{attention_block.1} parent=0 // pred_region
    _
  $region21: #{attention_block.1} parent=0 // pred_fallthru
    _
  // Predicated region
  $region22: #{attention_block.1} parent=0 // pred_check
    _
  $region23: #{attention_block.1} parent=0 // pred_check_branch
    %1841 = sbr.rel (0) target = $region25
  $region24: #{attention_block.1} parent=0 // pred_region
    _
  $region25: #{attention_block.1} parent=0 // pred_fallthru
    _

</llo_original>
